<compile_context>
chip_gen: v6e
topology: v6e:2x2x1
jax: 0.10.0
libtpu: 0.0.40
codegen_flags: <defaults>
</compile_context>

<pallas_src>
import functools

import jax
import jax.numpy as jnp
from jax import lax
from jax.experimental import pallas as pl
from jax.experimental.pallas import tpu as pltpu


def _lstm_fc_softmax_kernel(x_ref, wih_ref, whh_ref, b_ref, fcw_ref, fcb_ref,
                            out_ref, xb_ref, *, seq_len, batch_pad, hidden_size):
    """LSTM recurrence (single real batch row) + final Linear + softmax."""
    T, Bp, H = seq_len, batch_pad, hidden_size

    # ---- Prologue: hoisted input projection (one big MXU pass, not T tiny) ---
    # xb[t*Bp:(t+1)*Bp, :] = x_t @ W_ih^T + (b_ih + b_hh) for every timestep.
    xb_ref[...] = (jnp.dot(x_ref[...], wih_ref[...],
                           preferred_element_type=jnp.float32)
                   + b_ref[...])                                      # (T*Bp, 4H)

    h = jnp.zeros((Bp, H), jnp.float32)
    c = jnp.zeros((Bp, H), jnp.float32)

    # Vreg-resident history of the real (row 0) hidden state, one row per t.
    hist = jnp.zeros((T, H), jnp.float32)
    row_ids = lax.broadcasted_iota(jnp.int32, (T, H), 0)   # hoisted out of loop

    # T is small & static -> fully unrolled at trace time; all slice starts are
    # Python constants (aligned, no dynamic-index relayouts in the serial loop).
    for t in range(T):
        xb_t = xb_ref[t * Bp:(t + 1) * Bp, :]                         # (Bp, 4H)
        gates = xb_t + jnp.dot(h, whh_ref[...],
                               preferred_element_type=jnp.float32)    # (Bp, 4H)
        # Gate order is i,f,o,g (columns permuted once in prepare_params):
        # one fused sigmoid over a contiguous 3H slab + one tanh.
        sig = jax.nn.sigmoid(gates[:, 0:3 * H])
        g_g = jnp.tanh(gates[:, 3 * H:4 * H])
        i_g = sig[:, 0:H]
        f_g = sig[:, H:2 * H]
        o_g = sig[:, 2 * H:3 * H]
        c = f_g * c + i_g * g_g
        h = o_g * jnp.tanh(c)
        # torch `out[:, -1, :]`: hidden of the last real batch column (row 0
        # here) at every timestep.  Select into the vreg-resident history; this
        # does not feed the recurrence, so it sits off the serial critical path.
        hist = jnp.where(row_ids == t, h[0:1, :], hist)

    # ---- Epilogue: Linear + softmax, lane-dense (O padded to 128 lanes). -----
    # Padded fc columns carry weight 0 and bias -1e30 -> softmax mass exactly 0.
    logits = (jnp.dot(hist, fcw_ref[...],
                      preferred_element_type=jnp.float32)
              + fcb_ref[...])                                         # (T, Opad)
    m = jnp.max(logits, axis=1, keepdims=True)
    e = jnp.exp(logits - m)
    out_ref[...] = e / jnp.sum(e, axis=1, keepdims=True)


def prepare_params(params, *, lane=128):
    """One-time conversion of PyTorch-layout weights into kernel layout.

    Returns only arrays (jit-friendly pytree): W_ih/W_hh transposed to (I,4H) /
    (H,4H) with gate columns reordered torch(i,f,g,o) -> kernel(i,f,o,g), merged
    bias as (1,4H), and fc weight/bias transposed + lane-padded to Opad.
    """
    H = params["w_hh"].shape[1]
    O = params["fc_w"].shape[0]
    Opad = ((O + lane - 1) // lane) * lane

    def reorder(w):  # rows stacked i,f,g,o (torch) -> i,f,o,g (kernel)
        return jnp.concatenate(
            [w[0:H], w[H:2 * H], w[3 * H:4 * H], w[2 * H:3 * H]], axis=0)

    wih_t = reorder(params["w_ih"].astype(jnp.float32)).T             # (I, 4H)
    whh_t = reorder(params["w_hh"].astype(jnp.float32)).T             # (H, 4H)
    b = reorder((params["b_ih"] + params["b_hh"]).astype(jnp.float32)
                ).reshape(1, 4 * H)                                   # (1, 4H)

    fcw_t = jnp.zeros((H, Opad), jnp.float32).at[:, :O].set(
        params["fc_w"].T.astype(jnp.float32))                         # (H, Opad)
    fcb = jnp.full((1, Opad), -1e30, jnp.float32).at[0, :O].set(
        params["fc_b"].astype(jnp.float32))                           # (1, Opad)

    return {"wih_t": wih_t, "whh_t": whh_t, "b": b, "fcw_t": fcw_t, "fcb": fcb}


@functools.partial(jax.jit, static_argnames=("output_size",))
def portfolio_lstm_forward(x, prepped, *, output_size):
    """x: (A, 1, B, C) float32; `prepped` comes from prepare_params (one-time)."""
    A, one, B, C = x.shape
    assert one == 1
    H = prepped["whh_t"].shape[0]
    Opad = prepped["fcw_t"].shape[1]
    O = output_size

    # torch `out[:, -1, :]` only ever reads the LAST batch column, and LSTM
    # batch columns evolve independently -> gather that one column and run the
    # recurrence on a single row, sublane-padded to Bp=8 (zero rows are never
    # read back and stay finite).
    Bp = 8
    x_last = x[:, 0, B - 1, :].astype(jnp.float32)                    # (A, C)
    x_pad = jnp.zeros((A, Bp, C), jnp.float32).at[:, 0, :].set(x_last)
    x2d = x_pad.reshape(A * Bp, C)

    kernel = functools.partial(_lstm_fc_softmax_kernel,
                               seq_len=A, batch_pad=Bp, hidden_size=H)

    out = pl.pallas_call(
        kernel,
        out_shape=jax.ShapeDtypeStruct((A, Opad), jnp.float32),
        in_specs=[pl.BlockSpec(memory_space=pltpu.MemorySpace.VMEM)] * 6,
        out_specs=pl.BlockSpec(memory_space=pltpu.MemorySpace.VMEM),
        scratch_shapes=[
            pltpu.VMEM((A * Bp, 4 * H), jnp.float32),  # hoisted x-projection
        ],
    )(x2d, prepped["wih_t"], prepped["whh_t"], prepped["b"],
      prepped["fcw_t"], prepped["fcb"])
    return out[:, :O]


def reference_forward(x, params):
    """Pure-JAX reference implementing the exact torch forward (f32)."""
    A, _, B, C = x.shape
    x3 = x.reshape(A, B, C).astype(jnp.float32)
    H = params["w_hh"].shape[1]
    wih, whh = params["w_ih"], params["w_hh"]
    b = params["b_ih"] + params["b_hh"]

    def step(carry, x_t):
        h, c = carry
        gates = x_t @ wih.T + h @ whh.T + b
        i = jax.nn.sigmoid(gates[:, :H])
        f = jax.nn.sigmoid(gates[:, H:2 * H])
        g = jnp.tanh(gates[:, 2 * H:3 * H])
        o = jax.nn.sigmoid(gates[:, 3 * H:])
        c = f * c + i * g
        h = o * jnp.tanh(c)
        return (h, c), h

    init = (jnp.zeros((B, H), jnp.float32), jnp.zeros((B, H), jnp.float32))
    _, hs = lax.scan(step, init, x3)                 # hs: (A, B, H)
    hist = hs[:, -1, :]                              # (A, H)  == out[:, -1, :]
    logits = hist @ params["fc_w"].T + params["fc_b"]
    return jax.nn.softmax(logits, axis=1)


def init_params(key, input_size, hidden_size, output_size):
    """Deterministic init with PyTorch-style U(-1/sqrt(H), 1/sqrt(H))."""
    ks = jax.random.split(key, 6)
    k = 1.0 / jnp.sqrt(hidden_size)
    u = lambda kk, shape: jax.random.uniform(kk, shape, jnp.float32, -k, k)
    return {
        "w_ih": u(ks[0], (4 * hidden_size, input_size)),
        "w_hh": u(ks[1], (4 * hidden_size, hidden_size)),
        "b_ih": u(ks[2], (4 * hidden_size,)),
        "b_hh": u(ks[3], (4 * hidden_size,)),
        "fc_w": u(ks[4], (output_size, hidden_size)),
        "fc_b": u(ks[5], (output_size,)),
    }


if __name__ == "__main__":
    # Small shapes consistent with the module's forward:
    #   x: (A=seq=8, 1, B=batch=4, C=input_size=16); hidden=128 (multiple of
    #   128 so gate slices are vreg-aligned), output=16.
    seq_len, batch, input_size = 8, 4, 16
    hidden_size, output_size = 128, 16

    key = jax.random.PRNGKey(0)
    kx, kp = jax.random.split(key)
    x = jax.random.normal(kx, (seq_len, 1, batch, input_size), jnp.float32)
    params = init_params(kp, input_size, hidden_size, output_size)

    prepped = prepare_params(params)   # one-time per model instance (hoisted)

    out = portfolio_lstm_forward(x, prepped, output_size=output_size)
    out = jax.block_until_ready(out)

    ref = reference_forward(x, params)
    assert out.shape == (seq_len, output_size)
    assert jnp.allclose(jnp.sum(out, axis=1), 1.0, atol=1e-5)
    assert jnp.allclose(out, ref, rtol=1e-3, atol=1e-4), "mismatch vs reference"

    print("KERNEL_OK")
</pallas_src>

<mosaic_0001>
module attributes {stable_mosaic.version = 11 : i64} {
  func.func @_lstm_fc_softmax_kernel(%arg0: memref<64x16xf32, #tpu.memory_space<vmem>>, %arg1: memref<16x512xf32, #tpu.memory_space<vmem>>, %arg2: memref<128x512xf32, #tpu.memory_space<vmem>>, %arg3: memref<1x512xf32, #tpu.memory_space<vmem>>, %arg4: memref<128x128xf32, #tpu.memory_space<vmem>>, %arg5: memref<1x128xf32, #tpu.memory_space<vmem>>, %arg6: memref<8x128xf32, #tpu.memory_space<vmem>>, %arg7: memref<64x512xf32, #tpu.memory_space<vmem>>) attributes {dimension_semantics = [], scalar_prefetch = 0 : i64, scratch_operands = 1 : i64, tpu.core_type = #tpu.core_type<tc>} {
    %c0 = arith.constant 0 : index
    %c0_0 = arith.constant 0 : index
    %0 = vector.load %arg0[%c0, %c0_0] : memref<64x16xf32, #tpu.memory_space<vmem>>, vector<64x16xf32>
    %c0_1 = arith.constant 0 : index
    %c0_2 = arith.constant 0 : index
    %1 = vector.load %arg1[%c0_1, %c0_2] : memref<16x512xf32, #tpu.memory_space<vmem>>, vector<16x512xf32>
    %cst = arith.constant dense<0.000000e+00> : vector<64x512xf32>
    %2 = tpu.matmul %0, %1, %cst {dimension_numbers = #tpu.dot_dimension_numbers<[1], [0], [0], [1], [0, 0, 1, 1], [], []>} : vector<64x16xf32>, vector<16x512xf32>, vector<64x512xf32> -> vector<64x512xf32>
    %c0_3 = arith.constant 0 : index
    %c0_4 = arith.constant 0 : index
    %3 = vector.load %arg3[%c0_3, %c0_4] : memref<1x512xf32, #tpu.memory_space<vmem>>, vector<1x512xf32>
    %4 = vector.broadcast %3 : vector<1x512xf32> to vector<64x512xf32>
    %5 = arith.addf %2, %4 : vector<64x512xf32>
    %c0_5 = arith.constant 0 : index
    %c0_6 = arith.constant 0 : index
    %6 = vector.load %arg7[%c0_5, %c0_6] : memref<64x512xf32, #tpu.memory_space<vmem>>, vector<64x512xf32>
    tpu.vector_store %arg7[%c0_5, %c0_6], %5 {strides = array<i32>} : memref<64x512xf32, #tpu.memory_space<vmem>>, vector<64x512xf32>,
    %cst_7 = arith.constant 0.000000e+00 : f32
    %7 = vector.broadcast %cst_7 : f32 to vector<8x128xf32>
    %cst_8 = arith.constant 0.000000e+00 : f32
    %8 = vector.broadcast %cst_8 : f32 to vector<8x128xf32>
    %cst_9 = arith.constant 0.000000e+00 : f32
    %9 = vector.broadcast %cst_9 : f32 to vector<8x128xf32>
    %10 = tpu.iota {dimensions = array<i32: 0>} : vector<8x128xi32>
    %c0_10 = arith.constant 0 : index
    %c0_11 = arith.constant 0 : index
    %11 = vector.load %arg7[%c0_10, %c0_11] : memref<64x512xf32, #tpu.memory_space<vmem>>, vector<8x512xf32>
    %c0_12 = arith.constant 0 : index
    %c0_13 = arith.constant 0 : index
    %12 = vector.load %arg2[%c0_12, %c0_13] : memref<128x512xf32, #tpu.memory_space<vmem>>, vector<128x512xf32>
    %cst_14 = arith.constant dense<0.000000e+00> : vector<8x512xf32>
    %13 = tpu.matmul %7, %12, %cst_14 {dimension_numbers = #tpu.dot_dimension_numbers<[1], [0], [0], [1], [0, 0, 1, 1], [], []>} : vector<8x128xf32>, vector<128x512xf32>, vector<8x512xf32> -> vector<8x512xf32>
    %14 = arith.addf %11, %13 : vector<8x512xf32>
    %15 = vector.extract_strided_slice %14 {offsets = [0, 0], sizes = [8, 384], strides = [1, 1]} : vector<8x512xf32> to vector<8x384xf32>
    %16 = arith.negf %15 : vector<8x384xf32>
    %17 = math.exp %16 : vector<8x384xf32>
    %cst_15 = arith.constant 1.000000e+00 : f32
    %18 = vector.broadcast %cst_15 : f32 to vector<8x384xf32>
    %19 = arith.addf %18, %17 : vector<8x384xf32>
    %20 = arith.divf %18, %19 : vector<8x384xf32>
    %21 = vector.extract_strided_slice %14 {offsets = [0, 384], sizes = [8, 128], strides = [1, 1]} : vector<8x512xf32> to vector<8x128xf32>
    %22 = math.tanh %21 : vector<8x128xf32>
    %23 = vector.extract_strided_slice %20 {offsets = [0, 0], sizes = [8, 128], strides = [1, 1]} : vector<8x384xf32> to vector<8x128xf32>
    %24 = vector.extract_strided_slice %20 {offsets = [0, 128], sizes = [8, 128], strides = [1, 1]} : vector<8x384xf32> to vector<8x128xf32>
    %25 = vector.extract_strided_slice %20 {offsets = [0, 256], sizes = [8, 128], strides = [1, 1]} : vector<8x384xf32> to vector<8x128xf32>
    %26 = arith.mulf %24, %8 : vector<8x128xf32>
    %27 = arith.mulf %23, %22 : vector<8x128xf32>
    %28 = arith.addf %26, %27 : vector<8x128xf32>
    %29 = math.tanh %28 : vector<8x128xf32>
    %30 = arith.mulf %25, %29 : vector<8x128xf32>
    %c0_i32 = arith.constant 0 : i32
    %31 = vector.broadcast %c0_i32 : i32 to vector<8x128xi32>
    %32 = arith.cmpi eq, %10, %31 : vector<8x128xi32>
    %33 = vector.extract_strided_slice %30 {offsets = [0, 0], sizes = [1, 128], strides = [1, 1]} : vector<8x128xf32> to vector<1x128xf32>
    %34 = vector.shape_cast %33 : vector<1x128xf32> to vector<1x128xf32>
    %35 = vector.broadcast %34 : vector<1x128xf32> to vector<8x128xf32>
    %36 = arith.select %32, %35, %9 : vector<8x128xi1>, vector<8x128xf32>
    %c8 = arith.constant 8 : index
    %c0_16 = arith.constant 0 : index
    %37 = vector.load %arg7[%c8, %c0_16] : memref<64x512xf32, #tpu.memory_space<vmem>>, vector<8x512xf32>
    %c0_17 = arith.constant 0 : index
    %c0_18 = arith.constant 0 : index
    %38 = vector.load %arg2[%c0_17, %c0_18] : memref<128x512xf32, #tpu.memory_space<vmem>>, vector<128x512xf32>
    %cst_19 = arith.constant dense<0.000000e+00> : vector<8x512xf32>
    %39 = tpu.matmul %30, %38, %cst_19 {dimension_numbers = #tpu.dot_dimension_numbers<[1], [0], [0], [1], [0, 0, 1, 1], [], []>} : vector<8x128xf32>, vector<128x512xf32>, vector<8x512xf32> -> vector<8x512xf32>
    %40 = arith.addf %37, %39 : vector<8x512xf32>
    %41 = vector.extract_strided_slice %40 {offsets = [0, 0], sizes = [8, 384], strides = [1, 1]} : vector<8x512xf32> to vector<8x384xf32>
    %42 = arith.negf %41 : vector<8x384xf32>
    %43 = math.exp %42 : vector<8x384xf32>
    %cst_20 = arith.constant 1.000000e+00 : f32
    %44 = vector.broadcast %cst_20 : f32 to vector<8x384xf32>
    %45 = arith.addf %44, %43 : vector<8x384xf32>
    %46 = arith.divf %44, %45 : vector<8x384xf32>
    %47 = vector.extract_strided_slice %40 {offsets = [0, 384], sizes = [8, 128], strides = [1, 1]} : vector<8x512xf32> to vector<8x128xf32>
    %48 = math.tanh %47 : vector<8x128xf32>
    %49 = vector.extract_strided_slice %46 {offsets = [0, 0], sizes = [8, 128], strides = [1, 1]} : vector<8x384xf32> to vector<8x128xf32>
    %50 = vector.extract_strided_slice %46 {offsets = [0, 128], sizes = [8, 128], strides = [1, 1]} : vector<8x384xf32> to vector<8x128xf32>
    %51 = vector.extract_strided_slice %46 {offsets = [0, 256], sizes = [8, 128], strides = [1, 1]} : vector<8x384xf32> to vector<8x128xf32>
    %52 = arith.mulf %50, %28 : vector<8x128xf32>
    %53 = arith.mulf %49, %48 : vector<8x128xf32>
    %54 = arith.addf %52, %53 : vector<8x128xf32>
    %55 = math.tanh %54 : vector<8x128xf32>
    %56 = arith.mulf %51, %55 : vector<8x128xf32>
    %c1_i32 = arith.constant 1 : i32
    %57 = vector.broadcast %c1_i32 : i32 to vector<8x128xi32>
    %58 = arith.cmpi eq, %10, %57 : vector<8x128xi32>
    %59 = vector.extract_strided_slice %56 {offsets = [0, 0], sizes = [1, 128], strides = [1, 1]} : vector<8x128xf32> to vector<1x128xf32>
    %60 = vector.shape_cast %59 : vector<1x128xf32> to vector<1x128xf32>
    %61 = vector.broadcast %60 : vector<1x128xf32> to vector<8x128xf32>
    %62 = arith.select %58, %61, %36 : vector<8x128xi1>, vector<8x128xf32>
    %c16 = arith.constant 16 : index
    %c0_21 = arith.constant 0 : index
    %63 = vector.load %arg7[%c16, %c0_21] : memref<64x512xf32, #tpu.memory_space<vmem>>, vector<8x512xf32>
    %c0_22 = arith.constant 0 : index
    %c0_23 = arith.constant 0 : index
    %64 = vector.load %arg2[%c0_22, %c0_23] : memref<128x512xf32, #tpu.memory_space<vmem>>, vector<128x512xf32>
    %cst_24 = arith.constant dense<0.000000e+00> : vector<8x512xf32>
    %65 = tpu.matmul %56, %64, %cst_24 {dimension_numbers = #tpu.dot_dimension_numbers<[1], [0], [0], [1], [0, 0, 1, 1], [], []>} : vector<8x128xf32>, vector<128x512xf32>, vector<8x512xf32> -> vector<8x512xf32>
    %66 = arith.addf %63, %65 : vector<8x512xf32>
    %67 = vector.extract_strided_slice %66 {offsets = [0, 0], sizes = [8, 384], strides = [1, 1]} : vector<8x512xf32> to vector<8x384xf32>
    %68 = arith.negf %67 : vector<8x384xf32>
    %69 = math.exp %68 : vector<8x384xf32>
    %cst_25 = arith.constant 1.000000e+00 : f32
    %70 = vector.broadcast %cst_25 : f32 to vector<8x384xf32>
    %71 = arith.addf %70, %69 : vector<8x384xf32>
    %72 = arith.divf %70, %71 : vector<8x384xf32>
    %73 = vector.extract_strided_slice %66 {offsets = [0, 384], sizes = [8, 128], strides = [1, 1]} : vector<8x512xf32> to vector<8x128xf32>
    %74 = math.tanh %73 : vector<8x128xf32>
    %75 = vector.extract_strided_slice %72 {offsets = [0, 0], sizes = [8, 128], strides = [1, 1]} : vector<8x384xf32> to vector<8x128xf32>
    %76 = vector.extract_strided_slice %72 {offsets = [0, 128], sizes = [8, 128], strides = [1, 1]} : vector<8x384xf32> to vector<8x128xf32>
    %77 = vector.extract_strided_slice %72 {offsets = [0, 256], sizes = [8, 128], strides = [1, 1]} : vector<8x384xf32> to vector<8x128xf32>
    %78 = arith.mulf %76, %54 : vector<8x128xf32>
    %79 = arith.mulf %75, %74 : vector<8x128xf32>
    %80 = arith.addf %78, %79 : vector<8x128xf32>
    %81 = math.tanh %80 : vector<8x128xf32>
    %82 = arith.mulf %77, %81 : vector<8x128xf32>
    %c2_i32 = arith.constant 2 : i32
    %83 = vector.broadcast %c2_i32 : i32 to vector<8x128xi32>
    %84 = arith.cmpi eq, %10, %83 : vector<8x128xi32>
    %85 = vector.extract_strided_slice %82 {offsets = [0, 0], sizes = [1, 128], strides = [1, 1]} : vector<8x128xf32> to vector<1x128xf32>
    %86 = vector.shape_cast %85 : vector<1x128xf32> to vector<1x128xf32>
    %87 = vector.broadcast %86 : vector<1x128xf32> to vector<8x128xf32>
    %88 = arith.select %84, %87, %62 : vector<8x128xi1>, vector<8x128xf32>
    %c24 = arith.constant 24 : index
    %c0_26 = arith.constant 0 : index
    %89 = vector.load %arg7[%c24, %c0_26] : memref<64x512xf32, #tpu.memory_space<vmem>>, vector<8x512xf32>
    %c0_27 = arith.constant 0 : index
    %c0_28 = arith.constant 0 : index
    %90 = vector.load %arg2[%c0_27, %c0_28] : memref<128x512xf32, #tpu.memory_space<vmem>>, vector<128x512xf32>
    %cst_29 = arith.constant dense<0.000000e+00> : vector<8x512xf32>
    %91 = tpu.matmul %82, %90, %cst_29 {dimension_numbers = #tpu.dot_dimension_numbers<[1], [0], [0], [1], [0, 0, 1, 1], [], []>} : vector<8x128xf32>, vector<128x512xf32>, vector<8x512xf32> -> vector<8x512xf32>
    %92 = arith.addf %89, %91 : vector<8x512xf32>
    %93 = vector.extract_strided_slice %92 {offsets = [0, 0], sizes = [8, 384], strides = [1, 1]} : vector<8x512xf32> to vector<8x384xf32>
    %94 = arith.negf %93 : vector<8x384xf32>
    %95 = math.exp %94 : vector<8x384xf32>
    %cst_30 = arith.constant 1.000000e+00 : f32
    %96 = vector.broadcast %cst_30 : f32 to vector<8x384xf32>
    %97 = arith.addf %96, %95 : vector<8x384xf32>
    %98 = arith.divf %96, %97 : vector<8x384xf32>
    %99 = vector.extract_strided_slice %92 {offsets = [0, 384], sizes = [8, 128], strides = [1, 1]} : vector<8x512xf32> to vector<8x128xf32>
    %100 = math.tanh %99 : vector<8x128xf32>
    %101 = vector.extract_strided_slice %98 {offsets = [0, 0], sizes = [8, 128], strides = [1, 1]} : vector<8x384xf32> to vector<8x128xf32>
    %102 = vector.extract_strided_slice %98 {offsets = [0, 128], sizes = [8, 128], strides = [1, 1]} : vector<8x384xf32> to vector<8x128xf32>
    %103 = vector.extract_strided_slice %98 {offsets = [0, 256], sizes = [8, 128], strides = [1, 1]} : vector<8x384xf32> to vector<8x128xf32>
    %104 = arith.mulf %102, %80 : vector<8x128xf32>
    %105 = arith.mulf %101, %100 : vector<8x128xf32>
    %106 = arith.addf %104, %105 : vector<8x128xf32>
    %107 = math.tanh %106 : vector<8x128xf32>
    %108 = arith.mulf %103, %107 : vector<8x128xf32>
    %c3_i32 = arith.constant 3 : i32
    %109 = vector.broadcast %c3_i32 : i32 to vector<8x128xi32>
    %110 = arith.cmpi eq, %10, %109 : vector<8x128xi32>
    %111 = vector.extract_strided_slice %108 {offsets = [0, 0], sizes = [1, 128], strides = [1, 1]} : vector<8x128xf32> to vector<1x128xf32>
    %112 = vector.shape_cast %111 : vector<1x128xf32> to vector<1x128xf32>
    %113 = vector.broadcast %112 : vector<1x128xf32> to vector<8x128xf32>
    %114 = arith.select %110, %113, %88 : vector<8x128xi1>, vector<8x128xf32>
    %c32 = arith.constant 32 : index
    %c0_31 = arith.constant 0 : index
    %115 = vector.load %arg7[%c32, %c0_31] : memref<64x512xf32, #tpu.memory_space<vmem>>, vector<8x512xf32>
    %c0_32 = arith.constant 0 : index
    %c0_33 = arith.constant 0 : index
    %116 = vector.load %arg2[%c0_32, %c0_33] : memref<128x512xf32, #tpu.memory_space<vmem>>, vector<128x512xf32>
    %cst_34 = arith.constant dense<0.000000e+00> : vector<8x512xf32>
    %117 = tpu.matmul %108, %116, %cst_34 {dimension_numbers = #tpu.dot_dimension_numbers<[1], [0], [0], [1], [0, 0, 1, 1], [], []>} : vector<8x128xf32>, vector<128x512xf32>, vector<8x512xf32> -> vector<8x512xf32>
    %118 = arith.addf %115, %117 : vector<8x512xf32>
    %119 = vector.extract_strided_slice %118 {offsets = [0, 0], sizes = [8, 384], strides = [1, 1]} : vector<8x512xf32> to vector<8x384xf32>
    %120 = arith.negf %119 : vector<8x384xf32>
    %121 = math.exp %120 : vector<8x384xf32>
    %cst_35 = arith.constant 1.000000e+00 : f32
    %122 = vector.broadcast %cst_35 : f32 to vector<8x384xf32>
    %123 = arith.addf %122, %121 : vector<8x384xf32>
    %124 = arith.divf %122, %123 : vector<8x384xf32>
    %125 = vector.extract_strided_slice %118 {offsets = [0, 384], sizes = [8, 128], strides = [1, 1]} : vector<8x512xf32> to vector<8x128xf32>
    %126 = math.tanh %125 : vector<8x128xf32>
    %127 = vector.extract_strided_slice %124 {offsets = [0, 0], sizes = [8, 128], strides = [1, 1]} : vector<8x384xf32> to vector<8x128xf32>
    %128 = vector.extract_strided_slice %124 {offsets = [0, 128], sizes = [8, 128], strides = [1, 1]} : vector<8x384xf32> to vector<8x128xf32>
    %129 = vector.extract_strided_slice %124 {offsets = [0, 256], sizes = [8, 128], strides = [1, 1]} : vector<8x384xf32> to vector<8x128xf32>
    %130 = arith.mulf %128, %106 : vector<8x128xf32>
    %131 = arith.mulf %127, %126 : vector<8x128xf32>
    %132 = arith.addf %130, %131 : vector<8x128xf32>
    %133 = math.tanh %132 : vector<8x128xf32>
    %134 = arith.mulf %129, %133 : vector<8x128xf32>
    %c4_i32 = arith.constant 4 : i32
    %135 = vector.broadcast %c4_i32 : i32 to vector<8x128xi32>
    %136 = arith.cmpi eq, %10, %135 : vector<8x128xi32>
    %137 = vector.extract_strided_slice %134 {offsets = [0, 0], sizes = [1, 128], strides = [1, 1]} : vector<8x128xf32> to vector<1x128xf32>
    %138 = vector.shape_cast %137 : vector<1x128xf32> to vector<1x128xf32>
    %139 = vector.broadcast %138 : vector<1x128xf32> to vector<8x128xf32>
    %140 = arith.select %136, %139, %114 : vector<8x128xi1>, vector<8x128xf32>
    %c40 = arith.constant 40 : index
    %c0_36 = arith.constant 0 : index
    %141 = vector.load %arg7[%c40, %c0_36] : memref<64x512xf32, #tpu.memory_space<vmem>>, vector<8x512xf32>
    %c0_37 = arith.constant 0 : index
    %c0_38 = arith.constant 0 : index
    %142 = vector.load %arg2[%c0_37, %c0_38] : memref<128x512xf32, #tpu.memory_space<vmem>>, vector<128x512xf32>
    %cst_39 = arith.constant dense<0.000000e+00> : vector<8x512xf32>
    %143 = tpu.matmul %134, %142, %cst_39 {dimension_numbers = #tpu.dot_dimension_numbers<[1], [0], [0], [1], [0, 0, 1, 1], [], []>} : vector<8x128xf32>, vector<128x512xf32>, vector<8x512xf32> -> vector<8x512xf32>
    %144 = arith.addf %141, %143 : vector<8x512xf32>
    %145 = vector.extract_strided_slice %144 {offsets = [0, 0], sizes = [8, 384], strides = [1, 1]} : vector<8x512xf32> to vector<8x384xf32>
    %146 = arith.negf %145 : vector<8x384xf32>
    %147 = math.exp %146 : vector<8x384xf32>
    %cst_40 = arith.constant 1.000000e+00 : f32
    %148 = vector.broadcast %cst_40 : f32 to vector<8x384xf32>
    %149 = arith.addf %148, %147 : vector<8x384xf32>
    %150 = arith.divf %148, %149 : vector<8x384xf32>
    %151 = vector.extract_strided_slice %144 {offsets = [0, 384], sizes = [8, 128], strides = [1, 1]} : vector<8x512xf32> to vector<8x128xf32>
    %152 = math.tanh %151 : vector<8x128xf32>
    %153 = vector.extract_strided_slice %150 {offsets = [0, 0], sizes = [8, 128], strides = [1, 1]} : vector<8x384xf32> to vector<8x128xf32>
    %154 = vector.extract_strided_slice %150 {offsets = [0, 128], sizes = [8, 128], strides = [1, 1]} : vector<8x384xf32> to vector<8x128xf32>
    %155 = vector.extract_strided_slice %150 {offsets = [0, 256], sizes = [8, 128], strides = [1, 1]} : vector<8x384xf32> to vector<8x128xf32>
    %156 = arith.mulf %154, %132 : vector<8x128xf32>
    %157 = arith.mulf %153, %152 : vector<8x128xf32>
    %158 = arith.addf %156, %157 : vector<8x128xf32>
    %159 = math.tanh %158 : vector<8x128xf32>
    %160 = arith.mulf %155, %159 : vector<8x128xf32>
    %c5_i32 = arith.constant 5 : i32
    %161 = vector.broadcast %c5_i32 : i32 to vector<8x128xi32>
    %162 = arith.cmpi eq, %10, %161 : vector<8x128xi32>
    %163 = vector.extract_strided_slice %160 {offsets = [0, 0], sizes = [1, 128], strides = [1, 1]} : vector<8x128xf32> to vector<1x128xf32>
    %164 = vector.shape_cast %163 : vector<1x128xf32> to vector<1x128xf32>
    %165 = vector.broadcast %164 : vector<1x128xf32> to vector<8x128xf32>
    %166 = arith.select %162, %165, %140 : vector<8x128xi1>, vector<8x128xf32>
    %c48 = arith.constant 48 : index
    %c0_41 = arith.constant 0 : index
    %167 = vector.load %arg7[%c48, %c0_41] : memref<64x512xf32, #tpu.memory_space<vmem>>, vector<8x512xf32>
    %c0_42 = arith.constant 0 : index
    %c0_43 = arith.constant 0 : index
    %168 = vector.load %arg2[%c0_42, %c0_43] : memref<128x512xf32, #tpu.memory_space<vmem>>, vector<128x512xf32>
    %cst_44 = arith.constant dense<0.000000e+00> : vector<8x512xf32>
    %169 = tpu.matmul %160, %168, %cst_44 {dimension_numbers = #tpu.dot_dimension_numbers<[1], [0], [0], [1], [0, 0, 1, 1], [], []>} : vector<8x128xf32>, vector<128x512xf32>, vector<8x512xf32> -> vector<8x512xf32>
    %170 = arith.addf %167, %169 : vector<8x512xf32>
    %171 = vector.extract_strided_slice %170 {offsets = [0, 0], sizes = [8, 384], strides = [1, 1]} : vector<8x512xf32> to vector<8x384xf32>
    %172 = arith.negf %171 : vector<8x384xf32>
    %173 = math.exp %172 : vector<8x384xf32>
    %cst_45 = arith.constant 1.000000e+00 : f32
    %174 = vector.broadcast %cst_45 : f32 to vector<8x384xf32>
    %175 = arith.addf %174, %173 : vector<8x384xf32>
    %176 = arith.divf %174, %175 : vector<8x384xf32>
    %177 = vector.extract_strided_slice %170 {offsets = [0, 384], sizes = [8, 128], strides = [1, 1]} : vector<8x512xf32> to vector<8x128xf32>
    %178 = math.tanh %177 : vector<8x128xf32>
    %179 = vector.extract_strided_slice %176 {offsets = [0, 0], sizes = [8, 128], strides = [1, 1]} : vector<8x384xf32> to vector<8x128xf32>
    %180 = vector.extract_strided_slice %176 {offsets = [0, 128], sizes = [8, 128], strides = [1, 1]} : vector<8x384xf32> to vector<8x128xf32>
    %181 = vector.extract_strided_slice %176 {offsets = [0, 256], sizes = [8, 128], strides = [1, 1]} : vector<8x384xf32> to vector<8x128xf32>
    %182 = arith.mulf %180, %158 : vector<8x128xf32>
    %183 = arith.mulf %179, %178 : vector<8x128xf32>
    %184 = arith.addf %182, %183 : vector<8x128xf32>
    %185 = math.tanh %184 : vector<8x128xf32>
    %186 = arith.mulf %181, %185 : vector<8x128xf32>
    %c6_i32 = arith.constant 6 : i32
    %187 = vector.broadcast %c6_i32 : i32 to vector<8x128xi32>
    %188 = arith.cmpi eq, %10, %187 : vector<8x128xi32>
    %189 = vector.extract_strided_slice %186 {offsets = [0, 0], sizes = [1, 128], strides = [1, 1]} : vector<8x128xf32> to vector<1x128xf32>
    %190 = vector.shape_cast %189 : vector<1x128xf32> to vector<1x128xf32>
    %191 = vector.broadcast %190 : vector<1x128xf32> to vector<8x128xf32>
    %192 = arith.select %188, %191, %166 : vector<8x128xi1>, vector<8x128xf32>
    %c56 = arith.constant 56 : index
    %c0_46 = arith.constant 0 : index
    %193 = vector.load %arg7[%c56, %c0_46] : memref<64x512xf32, #tpu.memory_space<vmem>>, vector<8x512xf32>
    %c0_47 = arith.constant 0 : index
    %c0_48 = arith.constant 0 : index
    %194 = vector.load %arg2[%c0_47, %c0_48] : memref<128x512xf32, #tpu.memory_space<vmem>>, vector<128x512xf32>
    %cst_49 = arith.constant dense<0.000000e+00> : vector<8x512xf32>
    %195 = tpu.matmul %186, %194, %cst_49 {dimension_numbers = #tpu.dot_dimension_numbers<[1], [0], [0], [1], [0, 0, 1, 1], [], []>} : vector<8x128xf32>, vector<128x512xf32>, vector<8x512xf32> -> vector<8x512xf32>
    %196 = arith.addf %193, %195 : vector<8x512xf32>
    %197 = vector.extract_strided_slice %196 {offsets = [0, 0], sizes = [8, 384], strides = [1, 1]} : vector<8x512xf32> to vector<8x384xf32>
    %198 = arith.negf %197 : vector<8x384xf32>
    %199 = math.exp %198 : vector<8x384xf32>
    %cst_50 = arith.constant 1.000000e+00 : f32
    %200 = vector.broadcast %cst_50 : f32 to vector<8x384xf32>
    %201 = arith.addf %200, %199 : vector<8x384xf32>
    %202 = arith.divf %200, %201 : vector<8x384xf32>
    %203 = vector.extract_strided_slice %196 {offsets = [0, 384], sizes = [8, 128], strides = [1, 1]} : vector<8x512xf32> to vector<8x128xf32>
    %204 = math.tanh %203 : vector<8x128xf32>
    %205 = vector.extract_strided_slice %202 {offsets = [0, 0], sizes = [8, 128], strides = [1, 1]} : vector<8x384xf32> to vector<8x128xf32>
    %206 = vector.extract_strided_slice %202 {offsets = [0, 128], sizes = [8, 128], strides = [1, 1]} : vector<8x384xf32> to vector<8x128xf32>
    %207 = vector.extract_strided_slice %202 {offsets = [0, 256], sizes = [8, 128], strides = [1, 1]} : vector<8x384xf32> to vector<8x128xf32>
    %208 = arith.mulf %206, %184 : vector<8x128xf32>
    %209 = arith.mulf %205, %204 : vector<8x128xf32>
    %210 = arith.addf %208, %209 : vector<8x128xf32>
    %211 = math.tanh %210 : vector<8x128xf32>
    %212 = arith.mulf %207, %211 : vector<8x128xf32>
    %c7_i32 = arith.constant 7 : i32
    %213 = vector.broadcast %c7_i32 : i32 to vector<8x128xi32>
    %214 = arith.cmpi eq, %10, %213 : vector<8x128xi32>
    %215 = vector.extract_strided_slice %212 {offsets = [0, 0], sizes = [1, 128], strides = [1, 1]} : vector<8x128xf32> to vector<1x128xf32>
    %216 = vector.shape_cast %215 : vector<1x128xf32> to vector<1x128xf32>
    %217 = vector.broadcast %216 : vector<1x128xf32> to vector<8x128xf32>
    %218 = arith.select %214, %217, %192 : vector<8x128xi1>, vector<8x128xf32>
    %c0_51 = arith.constant 0 : index
    %c0_52 = arith.constant 0 : index
    %219 = vector.load %arg4[%c0_51, %c0_52] : memref<128x128xf32, #tpu.memory_space<vmem>>, vector<128x128xf32>
    %cst_53 = arith.constant dense<0.000000e+00> : vector<8x128xf32>
    %220 = tpu.matmul %218, %219, %cst_53 {dimension_numbers = #tpu.dot_dimension_numbers<[1], [0], [0], [1], [0, 0, 1, 1], [], []>} : vector<8x128xf32>, vector<128x128xf32>, vector<8x128xf32> -> vector<8x128xf32>
    %c0_54 = arith.constant 0 : index
    %c0_55 = arith.constant 0 : index
    %221 = vector.load %arg5[%c0_54, %c0_55] : memref<1x128xf32, #tpu.memory_space<vmem>>, vector<1x128xf32>
    %222 = vector.broadcast %221 : vector<1x128xf32> to vector<8x128xf32>
    %223 = arith.addf %220, %222 : vector<8x128xf32>
    %cst_56 = arith.constant dense<0xFF800000> : vector<8xf32>
    %224 = vector.multi_reduction <maximumf>, %223, %cst_56 [1] : vector<8x128xf32> to vector<8xf32>
    %225 = vector.shape_cast %224 : vector<8xf32> to vector<8x1xf32>
    %226 = vector.broadcast %225 : vector<8x1xf32> to vector<8x128xf32>
    %227 = arith.subf %223, %226 : vector<8x128xf32>
    %228 = math.exp %227 : vector<8x128xf32>
    %cst_57 = arith.constant dense<0.000000e+00> : vector<8xf32>
    %229 = vector.multi_reduction <add>, %228, %cst_57 [1] : vector<8x128xf32> to vector<8xf32>
    %230 = vector.shape_cast %229 : vector<8xf32> to vector<8x1xf32>
    %231 = vector.broadcast %230 : vector<8x1xf32> to vector<8x128xf32>
    %232 = arith.divf %228, %231 : vector<8x128xf32>
    %c0_58 = arith.constant 0 : index
    %c0_59 = arith.constant 0 : index
    %233 = vector.load %arg6[%c0_58, %c0_59] : memref<8x128xf32, #tpu.memory_space<vmem>>, vector<8x128xf32>
    tpu.vector_store %arg6[%c0_58, %c0_59], %232 {strides = array<i32>} : memref<8x128xf32, #tpu.memory_space<vmem>>, vector<8x128xf32>,
    return
  }
}

</mosaic_0001>

<llo_original>
// kernel: portfolio_lstm_forward.1
$region0: #{portfolio_lstm_forward.1}
  #allocation0 [shape = 'u32[]', space=smem, size = 0x4, offset = 0x4, fixed_abs, tag = 'smem constant byte address 0x4 - core index']
  #allocation1 [shape = 'u32[144,128]{1,0:T(1,128)}', space=vmem, size = 0x12000, scoped, tag = 'internal scratch']
  #allocation2 [shape = 'f32[64,512]{1,0:T(8,128)}', space=vmem, size = 0x20000, scoped, tag = 'scratch operand']
  %s0 = inlined_call_operand.vmem [shape: f32[64,16], index: 0, kind: input, shape index: {}]
  %s1 = inlined_call_operand.vmem [shape: f32[16,512], index: 1, kind: input, shape index: {}]
  %s2 = inlined_call_operand.hbm [shape: f32[128,512], index: 2, kind: input, shape index: {}]
  %s3 = inlined_call_operand.vmem [shape: f32[1,512], index: 3, kind: input, shape index: {}]
  %s4 = inlined_call_operand.hbm [shape: f32[128,128], index: 4, kind: input, shape index: {}]
  %s5 = inlined_call_operand.vmem [shape: f32[1,128], index: 5, kind: input, shape index: {}]
  %s6 = inlined_call_operand.hbm [shape: f32[8,128], index: 6, kind: output, shape index: {}]
  %s7 = sld [smem:[#allocation0]]
  $region42: #{portfolio_lstm_forward.1} parent=0
    _
  %s9 = ssub.s32 1, %s7
  %s10 = scalar_select 0, %s9, %s7
  $region1: #{portfolio_lstm_forward.1} parent=0
    #allocation3 [shape = 'u8[262144]{0}', space=vmem, size = 0x40000, scoped, tag = 'input window, operand 2, single buffered']
    #allocation4 [shape = 's32[1]{0}', space=sflag, size = 0x4, scoped, tag = 'scoped memory for portfolio_lstm_forward.1']
    #allocation5 [shape = 's32[1]{0}', space=sflag, size = 0x4, scoped, tag = 'scoped memory for portfolio_lstm_forward.1']
    #allocation6 [shape = 'u8[65536]{0}', space=vmem, size = 0x10000, scoped, tag = 'input window, operand 4, single buffered']
    #allocation7 [shape = 's32[1]{0}', space=sflag, size = 0x4, scoped, tag = 'scoped memory for portfolio_lstm_forward.1']
    #allocation8 [shape = 'u8[4096]{0}', space=vmem, size = 0x1000, scoped, tag = 'output window, operand 0, single buffered']
    %11 = vsyncpa [#allocation4], 0
    %12 = vsyncpa [#allocation7], 0
    %13 = vsyncpa [#allocation5], 0
    // Predicated region
    $region2: #{portfolio_lstm_forward.1} parent=1 // pred_check
      _
    $region3: #{portfolio_lstm_forward.1} parent=1 // pred_check_branch
      %15 = sbr.rel (0) target = $region5
    $region4: #{portfolio_lstm_forward.1} parent=1 // pred_region
      _
    $region5: #{portfolio_lstm_forward.1} parent=1 // pred_fallthru
      _
    // Predicated region
    $region6: #{portfolio_lstm_forward.1} parent=1 // pred_check
      _
    $region7: #{portfolio_lstm_forward.1} parent=1 // pred_check_branch
      %17 = sbr.rel (0) target = $region9
    $region8: #{portfolio_lstm_forward.1} parent=1 // pred_region
      _
    $region9: #{portfolio_lstm_forward.1} parent=1 // pred_fallthru
      _
    // Predicated region
    $region10: #{portfolio_lstm_forward.1} parent=1 // pred_check
      _
    $region11: #{portfolio_lstm_forward.1} parent=1 // pred_check_branch
      %19 = sbr.rel (0) target = $region13
    $region12: #{portfolio_lstm_forward.1} parent=1 // pred_region
      %s21 = ssub.s32 8192, 8192
      %22 = vsyncadd [#allocation4], %s21
      %s23 = sshll.u32 [#allocation3], 4
      %s24 = int_to_ptr.vmem [resolvable:$true] %s23
      %29 = dma.hbm_to_vmem [thread:$0]  %s2, 8192, %s24, [#allocation4], 512, 512, 32
    $region13: #{portfolio_lstm_forward.1} parent=1 // pred_fallthru
      _
    // Predicated region
    $region14: #{portfolio_lstm_forward.1} parent=1 // pred_check
      _
    $region15: #{portfolio_lstm_forward.1} parent=1 // pred_check_branch
      %31 = sbr.rel (0) target = $region17
    $region16: #{portfolio_lstm_forward.1} parent=1 // pred_region
      _
    $region17: #{portfolio_lstm_forward.1} parent=1 // pred_fallthru
      _
    // Predicated region
    $region18: #{portfolio_lstm_forward.1} parent=1 // pred_check
      _
    $region19: #{portfolio_lstm_forward.1} parent=1 // pred_check_branch
      %33 = sbr.rel (0) target = $region21
    $region20: #{portfolio_lstm_forward.1} parent=1 // pred_region
      %s35 = ssub.s32 2048, 2048
      %36 = vsyncadd [#allocation7], %s35
      %s37 = sshll.u32 [#allocation6], 4
      %s38 = int_to_ptr.vmem [resolvable:$true] %s37
      %43 = dma.hbm_to_vmem [thread:$0]  %s4, 2048, %s38, [#allocation7], 128, 128, 8
    $region21: #{portfolio_lstm_forward.1} parent=1 // pred_fallthru
      _
    // Predicated region
    $region22: #{portfolio_lstm_forward.1} parent=1 // pred_check
      _
    $region23: #{portfolio_lstm_forward.1} parent=1 // pred_check_branch
      %45 = sbr.rel (0) target = $region25
    $region24: #{portfolio_lstm_forward.1} parent=1 // pred_region
      _
    $region25: #{portfolio_lstm_forward.1} parent=1 // pred_fallthru
      _
    // Predicated region
    $region26: #{portfolio_lstm_forward.1} parent=1 // pred_check
      _
    $region27: #{portfolio_lstm_forward.1} parent=1 // pred_check_branch
      %47 = sbr.rel (0) target = $region29
    $region28: #{portfolio_lstm_forward.1} parent=1 // pred_region
      %48 = dma.done [#allocation4], 8192
    $region29: #{portfolio_lstm_forward.1} parent=1 // pred_fallthru
      _
    // Predicated region
    $region30: #{portfolio_lstm_forward.1} parent=1 // pred_check
      _
    $region31: #{portfolio_lstm_forward.1} parent=1 // pred_check_branch
      %50 = sbr.rel (0) target = $region33
    $region32: #{portfolio_lstm_forward.1} parent=1 // pred_region
      %51 = dma.done [#allocation7], 2048
    $region33: #{portfolio_lstm_forward.1} parent=1 // pred_fallthru
      _
    %v52 = vld [vmem:[%s0] sm:$0xff]
    %v53 = vld [vmem:[%s0 + $0x8] sm:$0xff]
    %v54 = vld [vmem:[%s0 + $0x10] sm:$0xff]
    %v55 = vld [vmem:[%s0 + $0x18] sm:$0xff]
    %v56 = vld [vmem:[%s0 + $0x20] sm:$0xff]
    %v57 = vld [vmem:[%s0 + $0x28] sm:$0xff]
    %v58 = vld [vmem:[%s0 + $0x30] sm:$0xff]
    %v59 = vld [vmem:[%s0 + $0x38] sm:$0xff]
    %v60 = vld [vmem:[%s1] sm:$0xff]
    %v61 = vld [vmem:[%s1 + $0x8] sm:$0xff]
    %v62 = vld [vmem:[%s1 + $0x10] sm:$0xff]
    %v63 = vld [vmem:[%s1 + $0x18] sm:$0xff]
    %v64 = vld [vmem:[%s1 + $0x20] sm:$0xff]
    %v65 = vld [vmem:[%s1 + $0x28] sm:$0xff]
    %v66 = vld [vmem:[%s1 + $0x30] sm:$0xff]
    %v67 = vld [vmem:[%s1 + $0x38] sm:$0xff]
    %v68 = vld [vmem:[%s3] sm:$0xf]
    %v70 = vlaneseq
    %v71 = vshrl.u32 %v70, 7
    %v72 = vsub.s32 0, %v71
    %v73 = vrot.slane %v68, %v72
    %v74 = vlaneseq
    %v75 = vshrl.u32 %v74, 7
    %v76 = vsub.s32 1, %v75
    %v77 = vrot.slane %v68, %v76
    %v78 = vlaneseq
    %v79 = vshrl.u32 %v78, 7
    %v80 = vsub.s32 2, %v79
    %v81 = vrot.slane %v68, %v80
    %v82 = vlaneseq
    %v83 = vshrl.u32 %v82, 7
    %v84 = vsub.s32 3, %v83
    %v85 = vrot.slane %v68, %v84
    %vm90 = vcmask 130048
    %v92 = vsel %vm90, %v52, 0
    %v95 = vsel %vm90, %v53, 0
    %v98 = vsel %vm90, %v54, 0
    %v101 = vsel %vm90, %v55, 0
    %v104 = vsel %vm90, %v56, 0
    %v107 = vsel %vm90, %v57, 0
    %v110 = vsel %vm90, %v58, 0
    %v113 = vsel %vm90, %v59, 0
    %115 = vmatprep.subr.mxu0 0.0
    %116 = vmatpush1.msra.mxu0 0.0
    %117 = vmatprep.subr.mxu0 0.0
    %118 = vmatpush1.msra.mxu0 0.0
    %119 = vmatprep.subr.mxu0 0.0
    %120 = vmatpush1.msra.mxu0 0.0
    %121 = vmatprep.subr.mxu0 0.0
    %122 = vmatpush1.msra.mxu0 0.0
    %123 = vmatprep.subr.mxu0 0.0
    %124 = vmatpush1.msra.mxu0 0.0
    %125 = vmatprep.subr.mxu0 0.0
    %126 = vmatpush1.msra.mxu0 0.0
    %127 = vmatprep.subr.mxu0 0.0
    %128 = vmatpush1.msra.mxu0 0.0
    %129 = vmatprep.subr.mxu0 0.0
    %130 = vmatpush1.msra.mxu0 0.0
    %131 = vmatprep.subr.mxu0 0.0
    %132 = vmatpush1.msra.mxu0 0.0
    %133 = vmatprep.subr.mxu0 0.0
    %134 = vmatpush1.msra.mxu0 0.0
    %135 = vmatprep.subr.mxu0 0.0
    %136 = vmatpush1.msra.mxu0 0.0
    %137 = vmatprep.subr.mxu0 0.0
    %138 = vmatpush1.msra.mxu0 0.0
    %139 = vmatprep.subr.mxu0 0.0
    %140 = vmatpush1.msra.mxu0 0.0
    %141 = vmatprep.subr.mxu0 0.0
    %142 = vmatpush1.msra.mxu0 0.0
    %143 = vmatprep.subr.mxu0 %v65
    %144 = vmatpush1.msra.mxu0 %v64
    %145 = vmatprep.subr.mxu0 %v61
    %146 = vmatpush1.msra.mxu0 %v60
    %147 = vmatprep.subr.mxu0 0.0
    %148 = vmatpush2.msra.mxu0 0.0
    %149 = vmatprep.subr.mxu0 0.0
    %150 = vmatpush2.msra.mxu0 0.0
    %151 = vmatprep.subr.mxu0 0.0
    %152 = vmatpush2.msra.mxu0 0.0
    %153 = vmatprep.subr.mxu0 0.0
    %154 = vmatpush2.msra.mxu0 0.0
    %155 = vmatprep.subr.mxu0 0.0
    %156 = vmatpush2.msra.mxu0 0.0
    %157 = vmatprep.subr.mxu0 0.0
    %158 = vmatpush2.msra.mxu0 0.0
    %159 = vmatprep.subr.mxu0 0.0
    %160 = vmatpush2.msra.mxu0 0.0
    %161 = vmatprep.subr.mxu0 0.0
    %162 = vmatpush2.msra.mxu0 0.0
    %163 = vmatprep.subr.mxu0 0.0
    %164 = vmatpush2.msra.mxu0 0.0
    %165 = vmatprep.subr.mxu0 0.0
    %166 = vmatpush2.msra.mxu0 0.0
    %167 = vmatprep.subr.mxu0 0.0
    %168 = vmatpush2.msra.mxu0 0.0
    %169 = vmatprep.subr.mxu0 0.0
    %170 = vmatpush2.msra.mxu0 0.0
    %171 = vmatprep.subr.mxu0 0.0
    %172 = vmatpush2.msra.mxu0 0.0
    %173 = vmatprep.subr.mxu0 0.0
    %174 = vmatpush2.msra.mxu0 0.0
    %175 = vmatprep.subr.mxu0 0.0
    %176 = vmatpush2.msra.mxu0 0.0
    %177 = vmatprep.subr.mxu0 0.0
    %178 = vmatpush2.msra.mxu0 0.0
    %179 = vmatprep.mubr.f32.mxu0 0.0
    %180 = vmatmul.mubr.f32.gmra.mxu0 %v92
    %v181 = vpop.f32.mrf.mxu0
    %v182 = vadd.f32 %v73, %v181
    %v183 = vpop.f32.mrf.mxu0
    %v184 = vadd.f32 %v77, %v183
    %185 = vmatprep.mubr.f32.mxu0 0.0
    %186 = vmatmul.mubr.f32.gmra.mxu0 %v95
    %v187 = vpop.f32.mrf.mxu0
    %v188 = vadd.f32 %v73, %v187
    %v189 = vpop.f32.mrf.mxu0
    %v190 = vadd.f32 %v77, %v189
    %191 = vmatprep.mubr.f32.mxu0 0.0
    %192 = vmatmul.mubr.f32.gmra.mxu0 %v98
    %v193 = vpop.f32.mrf.mxu0
    %v194 = vadd.f32 %v73, %v193
    %v195 = vpop.f32.mrf.mxu0
    %v196 = vadd.f32 %v77, %v195
    %197 = vmatprep.mubr.f32.mxu0 0.0
    %198 = vmatmul.mubr.f32.gmra.mxu0 %v101
    %v199 = vpop.f32.mrf.mxu0
    %v200 = vadd.f32 %v73, %v199
    %v201 = vpop.f32.mrf.mxu0
    %v202 = vadd.f32 %v77, %v201
    %203 = vmatprep.mubr.f32.mxu0 0.0
    %204 = vmatmul.mubr.f32.gmra.mxu0 %v104
    %v205 = vpop.f32.mrf.mxu0
    %v206 = vadd.f32 %v73, %v205
    %v207 = vpop.f32.mrf.mxu0
    %v208 = vadd.f32 %v77, %v207
    %209 = vmatprep.mubr.f32.mxu0 0.0
    %210 = vmatmul.mubr.f32.gmra.mxu0 %v107
    %v211 = vpop.f32.mrf.mxu0
    %v212 = vadd.f32 %v73, %v211
    %v213 = vpop.f32.mrf.mxu0
    %v214 = vadd.f32 %v77, %v213
    %215 = vmatprep.mubr.f32.mxu0 0.0
    %216 = vmatmul.mubr.f32.gmra.mxu0 %v110
    %v217 = vpop.f32.mrf.mxu0
    %v218 = vadd.f32 %v73, %v217
    %v219 = vpop.f32.mrf.mxu0
    %v220 = vadd.f32 %v77, %v219
    %221 = vmatprep.mubr.f32.mxu0 0.0
    %222 = vmatmul.mubr.f32.gmra.mxu0 %v113
    %v223 = vpop.f32.mrf.mxu0
    %v224 = vadd.f32 %v73, %v223
    %v225 = vpop.f32.mrf.mxu0
    %v226 = vadd.f32 %v77, %v225
    %227 = vdwg.mxu0
    %228 = vmatprep.subr.mxu0 0.0
    %229 = vmatpush1.msra.mxu0 0.0
    %230 = vmatprep.subr.mxu0 0.0
    %231 = vmatpush1.msra.mxu0 0.0
    %232 = vmatprep.subr.mxu0 0.0
    %233 = vmatpush1.msra.mxu0 0.0
    %234 = vmatprep.subr.mxu0 0.0
    %235 = vmatpush1.msra.mxu0 0.0
    %236 = vmatprep.subr.mxu0 0.0
    %237 = vmatpush1.msra.mxu0 0.0
    %238 = vmatprep.subr.mxu0 0.0
    %239 = vmatpush1.msra.mxu0 0.0
    %240 = vmatprep.subr.mxu0 0.0
    %241 = vmatpush1.msra.mxu0 0.0
    %242 = vmatprep.subr.mxu0 0.0
    %243 = vmatpush1.msra.mxu0 0.0
    %244 = vmatprep.subr.mxu0 0.0
    %245 = vmatpush1.msra.mxu0 0.0
    %246 = vmatprep.subr.mxu0 0.0
    %247 = vmatpush1.msra.mxu0 0.0
    %248 = vmatprep.subr.mxu0 0.0
    %249 = vmatpush1.msra.mxu0 0.0
    %250 = vmatprep.subr.mxu0 0.0
    %251 = vmatpush1.msra.mxu0 0.0
    %252 = vmatprep.subr.mxu0 0.0
    %253 = vmatpush1.msra.mxu0 0.0
    %254 = vmatprep.subr.mxu0 0.0
    %255 = vmatpush1.msra.mxu0 0.0
    %256 = vmatprep.subr.mxu0 %v67
    %257 = vmatpush1.msra.mxu0 %v66
    %258 = vmatprep.subr.mxu0 %v63
    %259 = vmatpush1.msra.mxu0 %v62
    %260 = vmatprep.subr.mxu0 0.0
    %261 = vmatpush2.msra.mxu0 0.0
    %262 = vmatprep.subr.mxu0 0.0
    %263 = vmatpush2.msra.mxu0 0.0
    %264 = vmatprep.subr.mxu0 0.0
    %265 = vmatpush2.msra.mxu0 0.0
    %266 = vmatprep.subr.mxu0 0.0
    %267 = vmatpush2.msra.mxu0 0.0
    %268 = vmatprep.subr.mxu0 0.0
    %269 = vmatpush2.msra.mxu0 0.0
    %270 = vmatprep.subr.mxu0 0.0
    %271 = vmatpush2.msra.mxu0 0.0
    %272 = vmatprep.subr.mxu0 0.0
    %273 = vmatpush2.msra.mxu0 0.0
    %274 = vmatprep.subr.mxu0 0.0
    %275 = vmatpush2.msra.mxu0 0.0
    %276 = vmatprep.subr.mxu0 0.0
    %277 = vmatpush2.msra.mxu0 0.0
    %278 = vmatprep.subr.mxu0 0.0
    %279 = vmatpush2.msra.mxu0 0.0
    %280 = vmatprep.subr.mxu0 0.0
    %281 = vmatpush2.msra.mxu0 0.0
    %282 = vmatprep.subr.mxu0 0.0
    %283 = vmatpush2.msra.mxu0 0.0
    %284 = vmatprep.subr.mxu0 0.0
    %285 = vmatpush2.msra.mxu0 0.0
    %286 = vmatprep.subr.mxu0 0.0
    %287 = vmatpush2.msra.mxu0 0.0
    %288 = vmatprep.subr.mxu0 0.0
    %289 = vmatpush2.msra.mxu0 0.0
    %290 = vmatprep.subr.mxu0 0.0
    %291 = vmatpush2.msra.mxu0 0.0
    %292 = vmatprep.mubr.f32.mxu0 0.0
    %293 = vmatmul.mubr.f32.gmra.mxu0 %v92
    %v294 = vpop.f32.mrf.mxu0
    %v295 = vadd.f32 %v81, %v294
    %v296 = vpop.f32.mrf.mxu0
    %v297 = vadd.f32 %v85, %v296
    %298 = vmatprep.mubr.f32.mxu0 0.0
    %299 = vmatmul.mubr.f32.gmra.mxu0 %v95
    %v300 = vpop.f32.mrf.mxu0
    %v301 = vadd.f32 %v81, %v300
    %v302 = vpop.f32.mrf.mxu0
    %v303 = vadd.f32 %v85, %v302
    %304 = vmatprep.mubr.f32.mxu0 0.0
    %305 = vmatmul.mubr.f32.gmra.mxu0 %v98
    %v306 = vpop.f32.mrf.mxu0
    %v307 = vadd.f32 %v81, %v306
    %v308 = vpop.f32.mrf.mxu0
    %v309 = vadd.f32 %v85, %v308
    %310 = vmatprep.mubr.f32.mxu0 0.0
    %311 = vmatmul.mubr.f32.gmra.mxu0 %v101
    %v312 = vpop.f32.mrf.mxu0
    %v313 = vadd.f32 %v81, %v312
    %v314 = vpop.f32.mrf.mxu0
    %v315 = vadd.f32 %v85, %v314
    %316 = vmatprep.mubr.f32.mxu0 0.0
    %317 = vmatmul.mubr.f32.gmra.mxu0 %v104
    %v318 = vpop.f32.mrf.mxu0
    %v319 = vadd.f32 %v81, %v318
    %v320 = vpop.f32.mrf.mxu0
    %v321 = vadd.f32 %v85, %v320
    %322 = vmatprep.mubr.f32.mxu0 0.0
    %323 = vmatmul.mubr.f32.gmra.mxu0 %v107
    %v324 = vpop.f32.mrf.mxu0
    %v325 = vadd.f32 %v81, %v324
    %v326 = vpop.f32.mrf.mxu0
    %v327 = vadd.f32 %v85, %v326
    %328 = vmatprep.mubr.f32.mxu0 0.0
    %329 = vmatmul.mubr.f32.gmra.mxu0 %v110
    %v330 = vpop.f32.mrf.mxu0
    %v331 = vadd.f32 %v81, %v330
    %v332 = vpop.f32.mrf.mxu0
    %v333 = vadd.f32 %v85, %v332
    %334 = vmatprep.mubr.f32.mxu0 0.0
    %335 = vmatmul.mubr.f32.gmra.mxu0 %v113
    %v336 = vpop.f32.mrf.mxu0
    %v337 = vadd.f32 %v81, %v336
    %v338 = vpop.f32.mrf.mxu0
    %v339 = vadd.f32 %v85, %v338
    %340 = vdwg.mxu0
    %341 = vst [vmem:[#allocation2] sm:$0xff] %v182
    %342 = vst [vmem:[#allocation2 + $0x8] sm:$0xff] %v184
    %343 = vst [vmem:[#allocation2 + $0x10] sm:$0xff] %v295
    %344 = vst [vmem:[#allocation2 + $0x18] sm:$0xff] %v297
    %345 = vst [vmem:[#allocation2 + $0x20] sm:$0xff] %v188
    %346 = vst [vmem:[#allocation2 + $0x28] sm:$0xff] %v190
    %347 = vst [vmem:[#allocation2 + $0x30] sm:$0xff] %v301
    %348 = vst [vmem:[#allocation2 + $0x38] sm:$0xff] %v303
    %349 = vst [vmem:[#allocation2 + $0x40] sm:$0xff] %v194
    %350 = vst [vmem:[#allocation2 + $0x48] sm:$0xff] %v196
    %351 = vst [vmem:[#allocation2 + $0x50] sm:$0xff] %v307
    %352 = vst [vmem:[#allocation2 + $0x58] sm:$0xff] %v309
    %353 = vst [vmem:[#allocation2 + $0x60] sm:$0xff] %v200
    %354 = vst [vmem:[#allocation2 + $0x68] sm:$0xff] %v202
    %355 = vst [vmem:[#allocation2 + $0x70] sm:$0xff] %v313
    %356 = vst [vmem:[#allocation2 + $0x78] sm:$0xff] %v315
    %357 = vst [vmem:[#allocation2 + $0x80] sm:$0xff] %v206
    %358 = vst [vmem:[#allocation2 + $0x88] sm:$0xff] %v208
    %359 = vst [vmem:[#allocation2 + $0x90] sm:$0xff] %v319
    %360 = vst [vmem:[#allocation2 + $0x98] sm:$0xff] %v321
    %361 = vst [vmem:[#allocation2 + $0xa0] sm:$0xff] %v212
    %362 = vst [vmem:[#allocation2 + $0xa8] sm:$0xff] %v214
    %363 = vst [vmem:[#allocation2 + $0xb0] sm:$0xff] %v325
    %364 = vst [vmem:[#allocation2 + $0xb8] sm:$0xff] %v327
    %365 = vst [vmem:[#allocation2 + $0xc0] sm:$0xff] %v218
    %366 = vst [vmem:[#allocation2 + $0xc8] sm:$0xff] %v220
    %367 = vst [vmem:[#allocation2 + $0xd0] sm:$0xff] %v331
    %368 = vst [vmem:[#allocation2 + $0xd8] sm:$0xff] %v333
    %369 = vst [vmem:[#allocation2 + $0xe0] sm:$0xff] %v224
    %370 = vst [vmem:[#allocation2 + $0xe8] sm:$0xff] %v226
    %371 = vst [vmem:[#allocation2 + $0xf0] sm:$0xff] %v337
    %372 = vst [vmem:[#allocation2 + $0xf8] sm:$0xff] %v339
    %v373 = vlaneseq
    %v374 = vshrl.u32 %v373, 7
    %v375 = vld [vmem:[#allocation2] sm:$0xff]
    %v376 = vld [vmem:[#allocation2 + $0x8] sm:$0xff]
    %v377 = vld [vmem:[#allocation2 + $0x10] sm:$0xff]
    %v378 = vld [vmem:[#allocation2 + $0x18] sm:$0xff]
    %v379 = vld [vmem:[#allocation3] sm:$0xff]
    %v380 = vld [vmem:[#allocation3 + $0x8] sm:$0xff]
    %v381 = vld [vmem:[#allocation3 + $0x10] sm:$0xff]
    %v382 = vld [vmem:[#allocation3 + $0x18] sm:$0xff]
    %v383 = vld [vmem:[#allocation3 + $0x20] sm:$0xff]
    %v384 = vld [vmem:[#allocation3 + $0x28] sm:$0xff]
    %v385 = vld [vmem:[#allocation3 + $0x30] sm:$0xff]
    %v386 = vld [vmem:[#allocation3 + $0x38] sm:$0xff]
    %v387 = vld [vmem:[#allocation3 + $0x40] sm:$0xff]
    %v388 = vld [vmem:[#allocation3 + $0x48] sm:$0xff]
    %v389 = vld [vmem:[#allocation3 + $0x50] sm:$0xff]
    %v390 = vld [vmem:[#allocation3 + $0x58] sm:$0xff]
    %v391 = vld [vmem:[#allocation3 + $0x60] sm:$0xff]
    %v392 = vld [vmem:[#allocation3 + $0x68] sm:$0xff]
    %v393 = vld [vmem:[#allocation3 + $0x70] sm:$0xff]
    %v394 = vld [vmem:[#allocation3 + $0x78] sm:$0xff]
    %v395 = vld [vmem:[#allocation3 + $0x80] sm:$0xff]
    %v396 = vld [vmem:[#allocation3 + $0x88] sm:$0xff]
    %v397 = vld [vmem:[#allocation3 + $0x90] sm:$0xff]
    %v398 = vld [vmem:[#allocation3 + $0x98] sm:$0xff]
    %v399 = vld [vmem:[#allocation3 + $0xa0] sm:$0xff]
    %v400 = vld [vmem:[#allocation3 + $0xa8] sm:$0xff]
    %v401 = vld [vmem:[#allocation3 + $0xb0] sm:$0xff]
    %v402 = vld [vmem:[#allocation3 + $0xb8] sm:$0xff]
    %v403 = vld [vmem:[#allocation3 + $0xc0] sm:$0xff]
    %v404 = vld [vmem:[#allocation3 + $0xc8] sm:$0xff]
    %v405 = vld [vmem:[#allocation3 + $0xd0] sm:$0xff]
    %v406 = vld [vmem:[#allocation3 + $0xd8] sm:$0xff]
    %v407 = vld [vmem:[#allocation3 + $0xe0] sm:$0xff]
    %v408 = vld [vmem:[#allocation3 + $0xe8] sm:$0xff]
    %v409 = vld [vmem:[#allocation3 + $0xf0] sm:$0xff]
    %v410 = vld [vmem:[#allocation3 + $0xf8] sm:$0xff]
    %v411 = vld [vmem:[#allocation3 + $0x100] sm:$0xff]
    %v412 = vld [vmem:[#allocation3 + $0x108] sm:$0xff]
    %v413 = vld [vmem:[#allocation3 + $0x110] sm:$0xff]
    %v414 = vld [vmem:[#allocation3 + $0x118] sm:$0xff]
    %v415 = vld [vmem:[#allocation3 + $0x120] sm:$0xff]
    %v416 = vld [vmem:[#allocation3 + $0x128] sm:$0xff]
    %v417 = vld [vmem:[#allocation3 + $0x130] sm:$0xff]
    %v418 = vld [vmem:[#allocation3 + $0x138] sm:$0xff]
    %v419 = vld [vmem:[#allocation3 + $0x140] sm:$0xff]
    %v420 = vld [vmem:[#allocation3 + $0x148] sm:$0xff]
    %v421 = vld [vmem:[#allocation3 + $0x150] sm:$0xff]
    %v422 = vld [vmem:[#allocation3 + $0x158] sm:$0xff]
    %v423 = vld [vmem:[#allocation3 + $0x160] sm:$0xff]
    %v424 = vld [vmem:[#allocation3 + $0x168] sm:$0xff]
    %v425 = vld [vmem:[#allocation3 + $0x170] sm:$0xff]
    %v426 = vld [vmem:[#allocation3 + $0x178] sm:$0xff]
    %v427 = vld [vmem:[#allocation3 + $0x180] sm:$0xff]
    %v428 = vld [vmem:[#allocation3 + $0x188] sm:$0xff]
    %v429 = vld [vmem:[#allocation3 + $0x190] sm:$0xff]
    %v430 = vld [vmem:[#allocation3 + $0x198] sm:$0xff]
    %v431 = vld [vmem:[#allocation3 + $0x1a0] sm:$0xff]
    %v432 = vld [vmem:[#allocation3 + $0x1a8] sm:$0xff]
    %v433 = vld [vmem:[#allocation3 + $0x1b0] sm:$0xff]
    %v434 = vld [vmem:[#allocation3 + $0x1b8] sm:$0xff]
    %v435 = vld [vmem:[#allocation3 + $0x1c0] sm:$0xff]
    %v436 = vld [vmem:[#allocation3 + $0x1c8] sm:$0xff]
    %v437 = vld [vmem:[#allocation3 + $0x1d0] sm:$0xff]
    %v438 = vld [vmem:[#allocation3 + $0x1d8] sm:$0xff]
    %v439 = vld [vmem:[#allocation3 + $0x1e0] sm:$0xff]
    %v440 = vld [vmem:[#allocation3 + $0x1e8] sm:$0xff]
    %v441 = vld [vmem:[#allocation3 + $0x1f0] sm:$0xff]
    %v442 = vld [vmem:[#allocation3 + $0x1f8] sm:$0xff]
    %443 = vmatprep.subr.mxu0 %v440
    %444 = vmatpush1.msra.mxu0 %v439
    %445 = vmatprep.subr.mxu0 %v436
    %446 = vmatpush1.msra.mxu0 %v435
    %447 = vmatprep.subr.mxu0 %v432
    %448 = vmatpush1.msra.mxu0 %v431
    %449 = vmatprep.subr.mxu0 %v428
    %450 = vmatpush1.msra.mxu0 %v427
    %451 = vmatprep.subr.mxu0 %v424
    %452 = vmatpush1.msra.mxu0 %v423
    %453 = vmatprep.subr.mxu0 %v420
    %454 = vmatpush1.msra.mxu0 %v419
    %455 = vmatprep.subr.mxu0 %v416
    %456 = vmatpush1.msra.mxu0 %v415
    %457 = vmatprep.subr.mxu0 %v412
    %458 = vmatpush1.msra.mxu0 %v411
    %459 = vmatprep.subr.mxu0 %v408
    %460 = vmatpush1.msra.mxu0 %v407
    %461 = vmatprep.subr.mxu0 %v404
    %462 = vmatpush1.msra.mxu0 %v403
    %463 = vmatprep.subr.mxu0 %v400
    %464 = vmatpush1.msra.mxu0 %v399
    %465 = vmatprep.subr.mxu0 %v396
    %466 = vmatpush1.msra.mxu0 %v395
    %467 = vmatprep.subr.mxu0 %v392
    %468 = vmatpush1.msra.mxu0 %v391
    %469 = vmatprep.subr.mxu0 %v388
    %470 = vmatpush1.msra.mxu0 %v387
    %471 = vmatprep.subr.mxu0 %v384
    %472 = vmatpush1.msra.mxu0 %v383
    %473 = vmatprep.subr.mxu0 %v380
    %474 = vmatpush1.msra.mxu0 %v379
    %475 = vmatprep.subr.mxu0 0.0
    %476 = vmatpush2.msra.mxu0 0.0
    %477 = vmatprep.subr.mxu0 0.0
    %478 = vmatpush2.msra.mxu0 0.0
    %479 = vmatprep.subr.mxu0 0.0
    %480 = vmatpush2.msra.mxu0 0.0
    %481 = vmatprep.subr.mxu0 0.0
    %482 = vmatpush2.msra.mxu0 0.0
    %483 = vmatprep.subr.mxu0 0.0
    %484 = vmatpush2.msra.mxu0 0.0
    %485 = vmatprep.subr.mxu0 0.0
    %486 = vmatpush2.msra.mxu0 0.0
    %487 = vmatprep.subr.mxu0 0.0
    %488 = vmatpush2.msra.mxu0 0.0
    %489 = vmatprep.subr.mxu0 0.0
    %490 = vmatpush2.msra.mxu0 0.0
    %491 = vmatprep.subr.mxu0 0.0
    %492 = vmatpush2.msra.mxu0 0.0
    %493 = vmatprep.subr.mxu0 0.0
    %494 = vmatpush2.msra.mxu0 0.0
    %495 = vmatprep.subr.mxu0 0.0
    %496 = vmatpush2.msra.mxu0 0.0
    %497 = vmatprep.subr.mxu0 0.0
    %498 = vmatpush2.msra.mxu0 0.0
    %499 = vmatprep.subr.mxu0 0.0
    %500 = vmatpush2.msra.mxu0 0.0
    %501 = vmatprep.subr.mxu0 0.0
    %502 = vmatpush2.msra.mxu0 0.0
    %503 = vmatprep.subr.mxu0 0.0
    %504 = vmatpush2.msra.mxu0 0.0
    %505 = vmatprep.subr.mxu0 0.0
    %506 = vmatpush2.msra.mxu0 0.0
    %507 = vmatprep.mubr.f32.mxu0 0.0
    %508 = vmatmul.mubr.f32.gmra.mxu0 0.0
    %v509 = vpop.f32.mrf.mxu0
    %v510 = vadd.f32 0.0, %v509
    %v511 = vpop.f32.mrf.mxu0
    %v512 = vadd.f32 0.0, %v511
    %513 = vdwg.mxu0
    %514 = vmatprep.subr.mxu0 %v442
    %515 = vmatpush1.msra.mxu0 %v441
    %516 = vmatprep.subr.mxu0 %v438
    %517 = vmatpush1.msra.mxu0 %v437
    %518 = vmatprep.subr.mxu0 %v434
    %519 = vmatpush1.msra.mxu0 %v433
    %520 = vmatprep.subr.mxu0 %v430
    %521 = vmatpush1.msra.mxu0 %v429
    %522 = vmatprep.subr.mxu0 %v426
    %523 = vmatpush1.msra.mxu0 %v425
    %524 = vmatprep.subr.mxu0 %v422
    %525 = vmatpush1.msra.mxu0 %v421
    %526 = vmatprep.subr.mxu0 %v418
    %527 = vmatpush1.msra.mxu0 %v417
    %528 = vmatprep.subr.mxu0 %v414
    %529 = vmatpush1.msra.mxu0 %v413
    %530 = vmatprep.subr.mxu0 %v410
    %531 = vmatpush1.msra.mxu0 %v409
    %532 = vmatprep.subr.mxu0 %v406
    %533 = vmatpush1.msra.mxu0 %v405
    %534 = vmatprep.subr.mxu0 %v402
    %535 = vmatpush1.msra.mxu0 %v401
    %536 = vmatprep.subr.mxu0 %v398
    %537 = vmatpush1.msra.mxu0 %v397
    %538 = vmatprep.subr.mxu0 %v394
    %539 = vmatpush1.msra.mxu0 %v393
    %540 = vmatprep.subr.mxu0 %v390
    %541 = vmatpush1.msra.mxu0 %v389
    %542 = vmatprep.subr.mxu0 %v386
    %543 = vmatpush1.msra.mxu0 %v385
    %544 = vmatprep.subr.mxu0 %v382
    %545 = vmatpush1.msra.mxu0 %v381
    %546 = vmatprep.subr.mxu0 0.0
    %547 = vmatpush2.msra.mxu0 0.0
    %548 = vmatprep.subr.mxu0 0.0
    %549 = vmatpush2.msra.mxu0 0.0
    %550 = vmatprep.subr.mxu0 0.0
    %551 = vmatpush2.msra.mxu0 0.0
    %552 = vmatprep.subr.mxu0 0.0
    %553 = vmatpush2.msra.mxu0 0.0
    %554 = vmatprep.subr.mxu0 0.0
    %555 = vmatpush2.msra.mxu0 0.0
    %556 = vmatprep.subr.mxu0 0.0
    %557 = vmatpush2.msra.mxu0 0.0
    %558 = vmatprep.subr.mxu0 0.0
    %559 = vmatpush2.msra.mxu0 0.0
    %560 = vmatprep.subr.mxu0 0.0
    %561 = vmatpush2.msra.mxu0 0.0
    %562 = vmatprep.subr.mxu0 0.0
    %563 = vmatpush2.msra.mxu0 0.0
    %564 = vmatprep.subr.mxu0 0.0
    %565 = vmatpush2.msra.mxu0 0.0
    %566 = vmatprep.subr.mxu0 0.0
    %567 = vmatpush2.msra.mxu0 0.0
    %568 = vmatprep.subr.mxu0 0.0
    %569 = vmatpush2.msra.mxu0 0.0
    %570 = vmatprep.subr.mxu0 0.0
    %571 = vmatpush2.msra.mxu0 0.0
    %572 = vmatprep.subr.mxu0 0.0
    %573 = vmatpush2.msra.mxu0 0.0
    %574 = vmatprep.subr.mxu0 0.0
    %575 = vmatpush2.msra.mxu0 0.0
    %576 = vmatprep.subr.mxu0 0.0
    %577 = vmatpush2.msra.mxu0 0.0
    %578 = vmatprep.mubr.f32.mxu0 0.0
    %579 = vmatmul.mubr.f32.gmra.mxu0 0.0
    %v580 = vpop.f32.mrf.mxu0
    %v581 = vadd.f32 0.0, %v580
    %v582 = vpop.f32.mrf.mxu0
    %v583 = vadd.f32 0.0, %v582
    %584 = vdwg.mxu0
    %v585 = vadd.f32 %v375, %v510
    %v586 = vadd.f32 %v376, %v512
    %v587 = vadd.f32 %v377, %v581
    %v588 = vadd.f32 %v378, %v583
    %v589 = vxor.u32 %v585, 2147483648
    %v590 = vxor.u32 %v586, 2147483648
    %v591 = vxor.u32 %v587, 2147483648
    %v592 = vmul.f32 %v589, 1.442695
    %v593 = vpow.pop %v592
    %v594 = vmul.f32 %v590, 1.442695
    %v595 = vpow.pop %v594
    %v596 = vmul.f32 %v591, 1.442695
    %v597 = vpow.pop %v596
    %v598 = vadd.f32 %v593, 1.0
    %v599 = vadd.f32 %v595, 1.0
    %v600 = vadd.f32 %v597, 1.0
    %v601 = vrcp.pop %v598
    %v602 = vmul.f32 1.0, %v601
    %v603 = vrcp.pop %v599
    %v604 = vmul.f32 1.0, %v603
    %v605 = vrcp.pop %v600
    %v606 = vmul.f32 1.0, %v605
    %v607 = vtanh.pop %v588
    %v608 = vmul.f32 %v604, 0.0
    %v609 = vmul.f32 %v602, %v607
    %v610 = vadd.f32 %v608, %v609
    %v611 = vtanh.pop %v610
    %v612 = vmul.f32 %v606, %v611
    %vm613 = vcmp.eq.s32.totalorder %v374, 0
    %v614 = vlaneseq
    %v615 = vshrl.u32 %v614, 7
    %v616 = vsub.s32 0, %v615
    %v617 = vrot.slane %v612, %v616
    %v618 = vsel %vm613, %v617, 0.0
    %v619 = vld [vmem:[#allocation2 + $0x20] sm:$0xff]
    %v620 = vld [vmem:[#allocation2 + $0x28] sm:$0xff]
    %v621 = vld [vmem:[#allocation2 + $0x30] sm:$0xff]
    %v622 = vld [vmem:[#allocation2 + $0x38] sm:$0xff]
    %623 = vmatprep.subr.mxu0 %v440
    %624 = vmatpush1.msra.mxu0 %v439
    %625 = vmatprep.subr.mxu0 %v436
    %626 = vmatpush1.msra.mxu0 %v435
    %627 = vmatprep.subr.mxu0 %v432
    %628 = vmatpush1.msra.mxu0 %v431
    %629 = vmatprep.subr.mxu0 %v428
    %630 = vmatpush1.msra.mxu0 %v427
    %631 = vmatprep.subr.mxu0 %v424
    %632 = vmatpush1.msra.mxu0 %v423
    %633 = vmatprep.subr.mxu0 %v420
    %634 = vmatpush1.msra.mxu0 %v419
    %635 = vmatprep.subr.mxu0 %v416
    %636 = vmatpush1.msra.mxu0 %v415
    %637 = vmatprep.subr.mxu0 %v412
    %638 = vmatpush1.msra.mxu0 %v411
    %639 = vmatprep.subr.mxu0 %v408
    %640 = vmatpush1.msra.mxu0 %v407
    %641 = vmatprep.subr.mxu0 %v404
    %642 = vmatpush1.msra.mxu0 %v403
    %643 = vmatprep.subr.mxu0 %v400
    %644 = vmatpush1.msra.mxu0 %v399
    %645 = vmatprep.subr.mxu0 %v396
    %646 = vmatpush1.msra.mxu0 %v395
    %647 = vmatprep.subr.mxu0 %v392
    %648 = vmatpush1.msra.mxu0 %v391
    %649 = vmatprep.subr.mxu0 %v388
    %650 = vmatpush1.msra.mxu0 %v387
    %651 = vmatprep.subr.mxu0 %v384
    %652 = vmatpush1.msra.mxu0 %v383
    %653 = vmatprep.subr.mxu0 %v380
    %654 = vmatpush1.msra.mxu0 %v379
    %655 = vmatprep.subr.mxu0 0.0
    %656 = vmatpush2.msra.mxu0 0.0
    %657 = vmatprep.subr.mxu0 0.0
    %658 = vmatpush2.msra.mxu0 0.0
    %659 = vmatprep.subr.mxu0 0.0
    %660 = vmatpush2.msra.mxu0 0.0
    %661 = vmatprep.subr.mxu0 0.0
    %662 = vmatpush2.msra.mxu0 0.0
    %663 = vmatprep.subr.mxu0 0.0
    %664 = vmatpush2.msra.mxu0 0.0
    %665 = vmatprep.subr.mxu0 0.0
    %666 = vmatpush2.msra.mxu0 0.0
    %667 = vmatprep.subr.mxu0 0.0
    %668 = vmatpush2.msra.mxu0 0.0
    %669 = vmatprep.subr.mxu0 0.0
    %670 = vmatpush2.msra.mxu0 0.0
    %671 = vmatprep.subr.mxu0 0.0
    %672 = vmatpush2.msra.mxu0 0.0
    %673 = vmatprep.subr.mxu0 0.0
    %674 = vmatpush2.msra.mxu0 0.0
    %675 = vmatprep.subr.mxu0 0.0
    %676 = vmatpush2.msra.mxu0 0.0
    %677 = vmatprep.subr.mxu0 0.0
    %678 = vmatpush2.msra.mxu0 0.0
    %679 = vmatprep.subr.mxu0 0.0
    %680 = vmatpush2.msra.mxu0 0.0
    %681 = vmatprep.subr.mxu0 0.0
    %682 = vmatpush2.msra.mxu0 0.0
    %683 = vmatprep.subr.mxu0 0.0
    %684 = vmatpush2.msra.mxu0 0.0
    %685 = vmatprep.subr.mxu0 0.0
    %686 = vmatpush2.msra.mxu0 0.0
    %687 = vmatprep.mubr.f32.mxu0 0.0
    %688 = vmatmul.mubr.f32.gmra.mxu0 %v612
    %v689 = vpop.f32.mrf.mxu0
    %v690 = vadd.f32 0.0, %v689
    %v691 = vpop.f32.mrf.mxu0
    %v692 = vadd.f32 0.0, %v691
    %693 = vdwg.mxu0
    %694 = vmatprep.subr.mxu0 %v442
    %695 = vmatpush1.msra.mxu0 %v441
    %696 = vmatprep.subr.mxu0 %v438
    %697 = vmatpush1.msra.mxu0 %v437
    %698 = vmatprep.subr.mxu0 %v434
    %699 = vmatpush1.msra.mxu0 %v433
    %700 = vmatprep.subr.mxu0 %v430
    %701 = vmatpush1.msra.mxu0 %v429
    %702 = vmatprep.subr.mxu0 %v426
    %703 = vmatpush1.msra.mxu0 %v425
    %704 = vmatprep.subr.mxu0 %v422
    %705 = vmatpush1.msra.mxu0 %v421
    %706 = vmatprep.subr.mxu0 %v418
    %707 = vmatpush1.msra.mxu0 %v417
    %708 = vmatprep.subr.mxu0 %v414
    %709 = vmatpush1.msra.mxu0 %v413
    %710 = vmatprep.subr.mxu0 %v410
    %711 = vmatpush1.msra.mxu0 %v409
    %712 = vmatprep.subr.mxu0 %v406
    %713 = vmatpush1.msra.mxu0 %v405
    %714 = vmatprep.subr.mxu0 %v402
    %715 = vmatpush1.msra.mxu0 %v401
    %716 = vmatprep.subr.mxu0 %v398
    %717 = vmatpush1.msra.mxu0 %v397
    %718 = vmatprep.subr.mxu0 %v394
    %719 = vmatpush1.msra.mxu0 %v393
    %720 = vmatprep.subr.mxu0 %v390
    %721 = vmatpush1.msra.mxu0 %v389
    %722 = vmatprep.subr.mxu0 %v386
    %723 = vmatpush1.msra.mxu0 %v385
    %724 = vmatprep.subr.mxu0 %v382
    %725 = vmatpush1.msra.mxu0 %v381
    %726 = vmatprep.subr.mxu0 0.0
    %727 = vmatpush2.msra.mxu0 0.0
    %728 = vmatprep.subr.mxu0 0.0
    %729 = vmatpush2.msra.mxu0 0.0
    %730 = vmatprep.subr.mxu0 0.0
    %731 = vmatpush2.msra.mxu0 0.0
    %732 = vmatprep.subr.mxu0 0.0
    %733 = vmatpush2.msra.mxu0 0.0
    %734 = vmatprep.subr.mxu0 0.0
    %735 = vmatpush2.msra.mxu0 0.0
    %736 = vmatprep.subr.mxu0 0.0
    %737 = vmatpush2.msra.mxu0 0.0
    %738 = vmatprep.subr.mxu0 0.0
    %739 = vmatpush2.msra.mxu0 0.0
    %740 = vmatprep.subr.mxu0 0.0
    %741 = vmatpush2.msra.mxu0 0.0
    %742 = vmatprep.subr.mxu0 0.0
    %743 = vmatpush2.msra.mxu0 0.0
    %744 = vmatprep.subr.mxu0 0.0
    %745 = vmatpush2.msra.mxu0 0.0
    %746 = vmatprep.subr.mxu0 0.0
    %747 = vmatpush2.msra.mxu0 0.0
    %748 = vmatprep.subr.mxu0 0.0
    %749 = vmatpush2.msra.mxu0 0.0
    %750 = vmatprep.subr.mxu0 0.0
    %751 = vmatpush2.msra.mxu0 0.0
    %752 = vmatprep.subr.mxu0 0.0
    %753 = vmatpush2.msra.mxu0 0.0
    %754 = vmatprep.subr.mxu0 0.0
    %755 = vmatpush2.msra.mxu0 0.0
    %756 = vmatprep.subr.mxu0 0.0
    %757 = vmatpush2.msra.mxu0 0.0
    %758 = vmatprep.mubr.f32.mxu0 0.0
    %759 = vmatmul.mubr.f32.gmra.mxu0 %v612
    %v760 = vpop.f32.mrf.mxu0
    %v761 = vadd.f32 0.0, %v760
    %v762 = vpop.f32.mrf.mxu0
    %v763 = vadd.f32 0.0, %v762
    %764 = vdwg.mxu0
    %v765 = vadd.f32 %v619, %v690
    %v766 = vadd.f32 %v620, %v692
    %v767 = vadd.f32 %v621, %v761
    %v768 = vadd.f32 %v622, %v763
    %v769 = vxor.u32 %v765, 2147483648
    %v770 = vxor.u32 %v766, 2147483648
    %v771 = vxor.u32 %v767, 2147483648
    %v772 = vmul.f32 %v769, 1.442695
    %v773 = vpow.pop %v772
    %v774 = vmul.f32 %v770, 1.442695
    %v775 = vpow.pop %v774
    %v776 = vmul.f32 %v771, 1.442695
    %v777 = vpow.pop %v776
    %v778 = vadd.f32 %v773, 1.0
    %v779 = vadd.f32 %v775, 1.0
    %v780 = vadd.f32 %v777, 1.0
    %v781 = vrcp.pop %v778
    %v782 = vmul.f32 1.0, %v781
    %v783 = vrcp.pop %v779
    %v784 = vmul.f32 1.0, %v783
    %v785 = vrcp.pop %v780
    %v786 = vmul.f32 1.0, %v785
    %v787 = vtanh.pop %v768
    %v788 = vmul.f32 %v784, %v610
    %v789 = vmul.f32 %v782, %v787
    %v790 = vadd.f32 %v788, %v789
    %v791 = vtanh.pop %v790
    %v792 = vmul.f32 %v786, %v791
    %vm793 = vcmp.eq.s32.totalorder %v374, 1
    %v794 = vlaneseq
    %v795 = vshrl.u32 %v794, 7
    %v796 = vsub.s32 0, %v795
    %v797 = vrot.slane %v792, %v796
    %v798 = vsel %vm793, %v797, %v618
    %v799 = vld [vmem:[#allocation2 + $0x40] sm:$0xff]
    %v800 = vld [vmem:[#allocation2 + $0x48] sm:$0xff]
    %v801 = vld [vmem:[#allocation2 + $0x50] sm:$0xff]
    %v802 = vld [vmem:[#allocation2 + $0x58] sm:$0xff]
    %803 = vmatprep.subr.mxu0 %v440
    %804 = vmatpush1.msra.mxu0 %v439
    %805 = vmatprep.subr.mxu0 %v436
    %806 = vmatpush1.msra.mxu0 %v435
    %807 = vmatprep.subr.mxu0 %v432
    %808 = vmatpush1.msra.mxu0 %v431
    %809 = vmatprep.subr.mxu0 %v428
    %810 = vmatpush1.msra.mxu0 %v427
    %811 = vmatprep.subr.mxu0 %v424
    %812 = vmatpush1.msra.mxu0 %v423
    %813 = vmatprep.subr.mxu0 %v420
    %814 = vmatpush1.msra.mxu0 %v419
    %815 = vmatprep.subr.mxu0 %v416
    %816 = vmatpush1.msra.mxu0 %v415
    %817 = vmatprep.subr.mxu0 %v412
    %818 = vmatpush1.msra.mxu0 %v411
    %819 = vmatprep.subr.mxu0 %v408
    %820 = vmatpush1.msra.mxu0 %v407
    %821 = vmatprep.subr.mxu0 %v404
    %822 = vmatpush1.msra.mxu0 %v403
    %823 = vmatprep.subr.mxu0 %v400
    %824 = vmatpush1.msra.mxu0 %v399
    %825 = vmatprep.subr.mxu0 %v396
    %826 = vmatpush1.msra.mxu0 %v395
    %827 = vmatprep.subr.mxu0 %v392
    %828 = vmatpush1.msra.mxu0 %v391
    %829 = vmatprep.subr.mxu0 %v388
    %830 = vmatpush1.msra.mxu0 %v387
    %831 = vmatprep.subr.mxu0 %v384
    %832 = vmatpush1.msra.mxu0 %v383
    %833 = vmatprep.subr.mxu0 %v380
    %834 = vmatpush1.msra.mxu0 %v379
    %835 = vmatprep.subr.mxu0 0.0
    %836 = vmatpush2.msra.mxu0 0.0
    %837 = vmatprep.subr.mxu0 0.0
    %838 = vmatpush2.msra.mxu0 0.0
    %839 = vmatprep.subr.mxu0 0.0
    %840 = vmatpush2.msra.mxu0 0.0
    %841 = vmatprep.subr.mxu0 0.0
    %842 = vmatpush2.msra.mxu0 0.0
    %843 = vmatprep.subr.mxu0 0.0
    %844 = vmatpush2.msra.mxu0 0.0
    %845 = vmatprep.subr.mxu0 0.0
    %846 = vmatpush2.msra.mxu0 0.0
    %847 = vmatprep.subr.mxu0 0.0
    %848 = vmatpush2.msra.mxu0 0.0
    %849 = vmatprep.subr.mxu0 0.0
    %850 = vmatpush2.msra.mxu0 0.0
    %851 = vmatprep.subr.mxu0 0.0
    %852 = vmatpush2.msra.mxu0 0.0
    %853 = vmatprep.subr.mxu0 0.0
    %854 = vmatpush2.msra.mxu0 0.0
    %855 = vmatprep.subr.mxu0 0.0
    %856 = vmatpush2.msra.mxu0 0.0
    %857 = vmatprep.subr.mxu0 0.0
    %858 = vmatpush2.msra.mxu0 0.0
    %859 = vmatprep.subr.mxu0 0.0
    %860 = vmatpush2.msra.mxu0 0.0
    %861 = vmatprep.subr.mxu0 0.0
    %862 = vmatpush2.msra.mxu0 0.0
    %863 = vmatprep.subr.mxu0 0.0
    %864 = vmatpush2.msra.mxu0 0.0
    %865 = vmatprep.subr.mxu0 0.0
    %866 = vmatpush2.msra.mxu0 0.0
    %867 = vmatprep.mubr.f32.mxu0 0.0
    %868 = vmatmul.mubr.f32.gmra.mxu0 %v792
    %v869 = vpop.f32.mrf.mxu0
    %v870 = vadd.f32 0.0, %v869
    %v871 = vpop.f32.mrf.mxu0
    %v872 = vadd.f32 0.0, %v871
    %873 = vdwg.mxu0
    %874 = vmatprep.subr.mxu0 %v442
    %875 = vmatpush1.msra.mxu0 %v441
    %876 = vmatprep.subr.mxu0 %v438
    %877 = vmatpush1.msra.mxu0 %v437
    %878 = vmatprep.subr.mxu0 %v434
    %879 = vmatpush1.msra.mxu0 %v433
    %880 = vmatprep.subr.mxu0 %v430
    %881 = vmatpush1.msra.mxu0 %v429
    %882 = vmatprep.subr.mxu0 %v426
    %883 = vmatpush1.msra.mxu0 %v425
    %884 = vmatprep.subr.mxu0 %v422
    %885 = vmatpush1.msra.mxu0 %v421
    %886 = vmatprep.subr.mxu0 %v418
    %887 = vmatpush1.msra.mxu0 %v417
    %888 = vmatprep.subr.mxu0 %v414
    %889 = vmatpush1.msra.mxu0 %v413
    %890 = vmatprep.subr.mxu0 %v410
    %891 = vmatpush1.msra.mxu0 %v409
    %892 = vmatprep.subr.mxu0 %v406
    %893 = vmatpush1.msra.mxu0 %v405
    %894 = vmatprep.subr.mxu0 %v402
    %895 = vmatpush1.msra.mxu0 %v401
    %896 = vmatprep.subr.mxu0 %v398
    %897 = vmatpush1.msra.mxu0 %v397
    %898 = vmatprep.subr.mxu0 %v394
    %899 = vmatpush1.msra.mxu0 %v393
    %900 = vmatprep.subr.mxu0 %v390
    %901 = vmatpush1.msra.mxu0 %v389
    %902 = vmatprep.subr.mxu0 %v386
    %903 = vmatpush1.msra.mxu0 %v385
    %904 = vmatprep.subr.mxu0 %v382
    %905 = vmatpush1.msra.mxu0 %v381
    %906 = vmatprep.subr.mxu0 0.0
    %907 = vmatpush2.msra.mxu0 0.0
    %908 = vmatprep.subr.mxu0 0.0
    %909 = vmatpush2.msra.mxu0 0.0
    %910 = vmatprep.subr.mxu0 0.0
    %911 = vmatpush2.msra.mxu0 0.0
    %912 = vmatprep.subr.mxu0 0.0
    %913 = vmatpush2.msra.mxu0 0.0
    %914 = vmatprep.subr.mxu0 0.0
    %915 = vmatpush2.msra.mxu0 0.0
    %916 = vmatprep.subr.mxu0 0.0
    %917 = vmatpush2.msra.mxu0 0.0
    %918 = vmatprep.subr.mxu0 0.0
    %919 = vmatpush2.msra.mxu0 0.0
    %920 = vmatprep.subr.mxu0 0.0
    %921 = vmatpush2.msra.mxu0 0.0
    %922 = vmatprep.subr.mxu0 0.0
    %923 = vmatpush2.msra.mxu0 0.0
    %924 = vmatprep.subr.mxu0 0.0
    %925 = vmatpush2.msra.mxu0 0.0
    %926 = vmatprep.subr.mxu0 0.0
    %927 = vmatpush2.msra.mxu0 0.0
    %928 = vmatprep.subr.mxu0 0.0
    %929 = vmatpush2.msra.mxu0 0.0
    %930 = vmatprep.subr.mxu0 0.0
    %931 = vmatpush2.msra.mxu0 0.0
    %932 = vmatprep.subr.mxu0 0.0
    %933 = vmatpush2.msra.mxu0 0.0
    %934 = vmatprep.subr.mxu0 0.0
    %935 = vmatpush2.msra.mxu0 0.0
    %936 = vmatprep.subr.mxu0 0.0
    %937 = vmatpush2.msra.mxu0 0.0
    %938 = vmatprep.mubr.f32.mxu0 0.0
    %939 = vmatmul.mubr.f32.gmra.mxu0 %v792
    %v940 = vpop.f32.mrf.mxu0
    %v941 = vadd.f32 0.0, %v940
    %v942 = vpop.f32.mrf.mxu0
    %v943 = vadd.f32 0.0, %v942
    %944 = vdwg.mxu0
    %v945 = vadd.f32 %v799, %v870
    %v946 = vadd.f32 %v800, %v872
    %v947 = vadd.f32 %v801, %v941
    %v948 = vadd.f32 %v802, %v943
    %v949 = vxor.u32 %v945, 2147483648
    %v950 = vxor.u32 %v946, 2147483648
    %v951 = vxor.u32 %v947, 2147483648
    %v952 = vmul.f32 %v949, 1.442695
    %v953 = vpow.pop %v952
    %v954 = vmul.f32 %v950, 1.442695
    %v955 = vpow.pop %v954
    %v956 = vmul.f32 %v951, 1.442695
    %v957 = vpow.pop %v956
    %v958 = vadd.f32 %v953, 1.0
    %v959 = vadd.f32 %v955, 1.0
    %v960 = vadd.f32 %v957, 1.0
    %v961 = vrcp.pop %v958
    %v962 = vmul.f32 1.0, %v961
    %v963 = vrcp.pop %v959
    %v964 = vmul.f32 1.0, %v963
    %v965 = vrcp.pop %v960
    %v966 = vmul.f32 1.0, %v965
    %v967 = vtanh.pop %v948
    %v968 = vmul.f32 %v964, %v790
    %v969 = vmul.f32 %v962, %v967
    %v970 = vadd.f32 %v968, %v969
    %v971 = vtanh.pop %v970
    %v972 = vmul.f32 %v966, %v971
    %vm973 = vcmp.eq.s32.totalorder %v374, 2
    %v974 = vlaneseq
    %v975 = vshrl.u32 %v974, 7
    %v976 = vsub.s32 0, %v975
    %v977 = vrot.slane %v972, %v976
    %v978 = vsel %vm973, %v977, %v798
    %v979 = vld [vmem:[#allocation2 + $0x60] sm:$0xff]
    %v980 = vld [vmem:[#allocation2 + $0x68] sm:$0xff]
    %v981 = vld [vmem:[#allocation2 + $0x70] sm:$0xff]
    %v982 = vld [vmem:[#allocation2 + $0x78] sm:$0xff]
    %983 = vmatprep.subr.mxu0 %v440
    %984 = vmatpush1.msra.mxu0 %v439
    %985 = vmatprep.subr.mxu0 %v436
    %986 = vmatpush1.msra.mxu0 %v435
    %987 = vmatprep.subr.mxu0 %v432
    %988 = vmatpush1.msra.mxu0 %v431
    %989 = vmatprep.subr.mxu0 %v428
    %990 = vmatpush1.msra.mxu0 %v427
    %991 = vmatprep.subr.mxu0 %v424
    %992 = vmatpush1.msra.mxu0 %v423
    %993 = vmatprep.subr.mxu0 %v420
    %994 = vmatpush1.msra.mxu0 %v419
    %995 = vmatprep.subr.mxu0 %v416
    %996 = vmatpush1.msra.mxu0 %v415
    %997 = vmatprep.subr.mxu0 %v412
    %998 = vmatpush1.msra.mxu0 %v411
    %999 = vmatprep.subr.mxu0 %v408
    %1000 = vmatpush1.msra.mxu0 %v407
    %1001 = vmatprep.subr.mxu0 %v404
    %1002 = vmatpush1.msra.mxu0 %v403
    %1003 = vmatprep.subr.mxu0 %v400
    %1004 = vmatpush1.msra.mxu0 %v399
    %1005 = vmatprep.subr.mxu0 %v396
    %1006 = vmatpush1.msra.mxu0 %v395
    %1007 = vmatprep.subr.mxu0 %v392
    %1008 = vmatpush1.msra.mxu0 %v391
    %1009 = vmatprep.subr.mxu0 %v388
    %1010 = vmatpush1.msra.mxu0 %v387
    %1011 = vmatprep.subr.mxu0 %v384
    %1012 = vmatpush1.msra.mxu0 %v383
    %1013 = vmatprep.subr.mxu0 %v380
    %1014 = vmatpush1.msra.mxu0 %v379
    %1015 = vmatprep.subr.mxu0 0.0
    %1016 = vmatpush2.msra.mxu0 0.0
    %1017 = vmatprep.subr.mxu0 0.0
    %1018 = vmatpush2.msra.mxu0 0.0
    %1019 = vmatprep.subr.mxu0 0.0
    %1020 = vmatpush2.msra.mxu0 0.0
    %1021 = vmatprep.subr.mxu0 0.0
    %1022 = vmatpush2.msra.mxu0 0.0
    %1023 = vmatprep.subr.mxu0 0.0
    %1024 = vmatpush2.msra.mxu0 0.0
    %1025 = vmatprep.subr.mxu0 0.0
    %1026 = vmatpush2.msra.mxu0 0.0
    %1027 = vmatprep.subr.mxu0 0.0
    %1028 = vmatpush2.msra.mxu0 0.0
    %1029 = vmatprep.subr.mxu0 0.0
    %1030 = vmatpush2.msra.mxu0 0.0
    %1031 = vmatprep.subr.mxu0 0.0
    %1032 = vmatpush2.msra.mxu0 0.0
    %1033 = vmatprep.subr.mxu0 0.0
    %1034 = vmatpush2.msra.mxu0 0.0
    %1035 = vmatprep.subr.mxu0 0.0
    %1036 = vmatpush2.msra.mxu0 0.0
    %1037 = vmatprep.subr.mxu0 0.0
    %1038 = vmatpush2.msra.mxu0 0.0
    %1039 = vmatprep.subr.mxu0 0.0
    %1040 = vmatpush2.msra.mxu0 0.0
    %1041 = vmatprep.subr.mxu0 0.0
    %1042 = vmatpush2.msra.mxu0 0.0
    %1043 = vmatprep.subr.mxu0 0.0
    %1044 = vmatpush2.msra.mxu0 0.0
    %1045 = vmatprep.subr.mxu0 0.0
    %1046 = vmatpush2.msra.mxu0 0.0
    %1047 = vmatprep.mubr.f32.mxu0 0.0
    %1048 = vmatmul.mubr.f32.gmra.mxu0 %v972
    %v1049 = vpop.f32.mrf.mxu0
    %v1050 = vadd.f32 0.0, %v1049
    %v1051 = vpop.f32.mrf.mxu0
    %v1052 = vadd.f32 0.0, %v1051
    %1053 = vdwg.mxu0
    %1054 = vmatprep.subr.mxu0 %v442
    %1055 = vmatpush1.msra.mxu0 %v441
    %1056 = vmatprep.subr.mxu0 %v438
    %1057 = vmatpush1.msra.mxu0 %v437
    %1058 = vmatprep.subr.mxu0 %v434
    %1059 = vmatpush1.msra.mxu0 %v433
    %1060 = vmatprep.subr.mxu0 %v430
    %1061 = vmatpush1.msra.mxu0 %v429
    %1062 = vmatprep.subr.mxu0 %v426
    %1063 = vmatpush1.msra.mxu0 %v425
    %1064 = vmatprep.subr.mxu0 %v422
    %1065 = vmatpush1.msra.mxu0 %v421
    %1066 = vmatprep.subr.mxu0 %v418
    %1067 = vmatpush1.msra.mxu0 %v417
    %1068 = vmatprep.subr.mxu0 %v414
    %1069 = vmatpush1.msra.mxu0 %v413
    %1070 = vmatprep.subr.mxu0 %v410
    %1071 = vmatpush1.msra.mxu0 %v409
    %1072 = vmatprep.subr.mxu0 %v406
    %1073 = vmatpush1.msra.mxu0 %v405
    %1074 = vmatprep.subr.mxu0 %v402
    %1075 = vmatpush1.msra.mxu0 %v401
    %1076 = vmatprep.subr.mxu0 %v398
    %1077 = vmatpush1.msra.mxu0 %v397
    %1078 = vmatprep.subr.mxu0 %v394
    %1079 = vmatpush1.msra.mxu0 %v393
    %1080 = vmatprep.subr.mxu0 %v390
    %1081 = vmatpush1.msra.mxu0 %v389
    %1082 = vmatprep.subr.mxu0 %v386
    %1083 = vmatpush1.msra.mxu0 %v385
    %1084 = vmatprep.subr.mxu0 %v382
    %1085 = vmatpush1.msra.mxu0 %v381
    %1086 = vmatprep.subr.mxu0 0.0
    %1087 = vmatpush2.msra.mxu0 0.0
    %1088 = vmatprep.subr.mxu0 0.0
    %1089 = vmatpush2.msra.mxu0 0.0
    %1090 = vmatprep.subr.mxu0 0.0
    %1091 = vmatpush2.msra.mxu0 0.0
    %1092 = vmatprep.subr.mxu0 0.0
    %1093 = vmatpush2.msra.mxu0 0.0
    %1094 = vmatprep.subr.mxu0 0.0
    %1095 = vmatpush2.msra.mxu0 0.0
    %1096 = vmatprep.subr.mxu0 0.0
    %1097 = vmatpush2.msra.mxu0 0.0
    %1098 = vmatprep.subr.mxu0 0.0
    %1099 = vmatpush2.msra.mxu0 0.0
    %1100 = vmatprep.subr.mxu0 0.0
    %1101 = vmatpush2.msra.mxu0 0.0
    %1102 = vmatprep.subr.mxu0 0.0
    %1103 = vmatpush2.msra.mxu0 0.0
    %1104 = vmatprep.subr.mxu0 0.0
    %1105 = vmatpush2.msra.mxu0 0.0
    %1106 = vmatprep.subr.mxu0 0.0
    %1107 = vmatpush2.msra.mxu0 0.0
    %1108 = vmatprep.subr.mxu0 0.0
    %1109 = vmatpush2.msra.mxu0 0.0
    %1110 = vmatprep.subr.mxu0 0.0
    %1111 = vmatpush2.msra.mxu0 0.0
    %1112 = vmatprep.subr.mxu0 0.0
    %1113 = vmatpush2.msra.mxu0 0.0
    %1114 = vmatprep.subr.mxu0 0.0
    %1115 = vmatpush2.msra.mxu0 0.0
    %1116 = vmatprep.subr.mxu0 0.0
    %1117 = vmatpush2.msra.mxu0 0.0
    %1118 = vmatprep.mubr.f32.mxu0 0.0
    %1119 = vmatmul.mubr.f32.gmra.mxu0 %v972
    %v1120 = vpop.f32.mrf.mxu0
    %v1121 = vadd.f32 0.0, %v1120
    %v1122 = vpop.f32.mrf.mxu0
    %v1123 = vadd.f32 0.0, %v1122
    %1124 = vdwg.mxu0
    %v1125 = vadd.f32 %v979, %v1050
    %v1126 = vadd.f32 %v980, %v1052
    %v1127 = vadd.f32 %v981, %v1121
    %v1128 = vadd.f32 %v982, %v1123
    %v1129 = vxor.u32 %v1125, 2147483648
    %v1130 = vxor.u32 %v1126, 2147483648
    %v1131 = vxor.u32 %v1127, 2147483648
    %v1132 = vmul.f32 %v1129, 1.442695
    %v1133 = vpow.pop %v1132
    %v1134 = vmul.f32 %v1130, 1.442695
    %v1135 = vpow.pop %v1134
    %v1136 = vmul.f32 %v1131, 1.442695
    %v1137 = vpow.pop %v1136
    %v1138 = vadd.f32 %v1133, 1.0
    %v1139 = vadd.f32 %v1135, 1.0
    %v1140 = vadd.f32 %v1137, 1.0
    %v1141 = vrcp.pop %v1138
    %v1142 = vmul.f32 1.0, %v1141
    %v1143 = vrcp.pop %v1139
    %v1144 = vmul.f32 1.0, %v1143
    %v1145 = vrcp.pop %v1140
    %v1146 = vmul.f32 1.0, %v1145
    %v1147 = vtanh.pop %v1128
    %v1148 = vmul.f32 %v1144, %v970
    %v1149 = vmul.f32 %v1142, %v1147
    %v1150 = vadd.f32 %v1148, %v1149
    %v1151 = vtanh.pop %v1150
    %v1152 = vmul.f32 %v1146, %v1151
    %vm1153 = vcmp.eq.s32.totalorder %v374, 3
    %v1154 = vlaneseq
    %v1155 = vshrl.u32 %v1154, 7
    %v1156 = vsub.s32 0, %v1155
    %v1157 = vrot.slane %v1152, %v1156
    %v1158 = vsel %vm1153, %v1157, %v978
    %v1159 = vld [vmem:[#allocation2 + $0x80] sm:$0xff]
    %v1160 = vld [vmem:[#allocation2 + $0x88] sm:$0xff]
    %v1161 = vld [vmem:[#allocation2 + $0x90] sm:$0xff]
    %v1162 = vld [vmem:[#allocation2 + $0x98] sm:$0xff]
    %1163 = vmatprep.subr.mxu0 %v440
    %1164 = vmatpush1.msra.mxu0 %v439
    %1165 = vmatprep.subr.mxu0 %v436
    %1166 = vmatpush1.msra.mxu0 %v435
    %1167 = vmatprep.subr.mxu0 %v432
    %1168 = vmatpush1.msra.mxu0 %v431
    %1169 = vmatprep.subr.mxu0 %v428
    %1170 = vmatpush1.msra.mxu0 %v427
    %1171 = vmatprep.subr.mxu0 %v424
    %1172 = vmatpush1.msra.mxu0 %v423
    %1173 = vmatprep.subr.mxu0 %v420
    %1174 = vmatpush1.msra.mxu0 %v419
    %1175 = vmatprep.subr.mxu0 %v416
    %1176 = vmatpush1.msra.mxu0 %v415
    %1177 = vmatprep.subr.mxu0 %v412
    %1178 = vmatpush1.msra.mxu0 %v411
    %1179 = vmatprep.subr.mxu0 %v408
    %1180 = vmatpush1.msra.mxu0 %v407
    %1181 = vmatprep.subr.mxu0 %v404
    %1182 = vmatpush1.msra.mxu0 %v403
    %1183 = vmatprep.subr.mxu0 %v400
    %1184 = vmatpush1.msra.mxu0 %v399
    %1185 = vmatprep.subr.mxu0 %v396
    %1186 = vmatpush1.msra.mxu0 %v395
    %1187 = vmatprep.subr.mxu0 %v392
    %1188 = vmatpush1.msra.mxu0 %v391
    %1189 = vmatprep.subr.mxu0 %v388
    %1190 = vmatpush1.msra.mxu0 %v387
    %1191 = vmatprep.subr.mxu0 %v384
    %1192 = vmatpush1.msra.mxu0 %v383
    %1193 = vmatprep.subr.mxu0 %v380
    %1194 = vmatpush1.msra.mxu0 %v379
    %1195 = vmatprep.subr.mxu0 0.0
    %1196 = vmatpush2.msra.mxu0 0.0
    %1197 = vmatprep.subr.mxu0 0.0
    %1198 = vmatpush2.msra.mxu0 0.0
    %1199 = vmatprep.subr.mxu0 0.0
    %1200 = vmatpush2.msra.mxu0 0.0
    %1201 = vmatprep.subr.mxu0 0.0
    %1202 = vmatpush2.msra.mxu0 0.0
    %1203 = vmatprep.subr.mxu0 0.0
    %1204 = vmatpush2.msra.mxu0 0.0
    %1205 = vmatprep.subr.mxu0 0.0
    %1206 = vmatpush2.msra.mxu0 0.0
    %1207 = vmatprep.subr.mxu0 0.0
    %1208 = vmatpush2.msra.mxu0 0.0
    %1209 = vmatprep.subr.mxu0 0.0
    %1210 = vmatpush2.msra.mxu0 0.0
    %1211 = vmatprep.subr.mxu0 0.0
    %1212 = vmatpush2.msra.mxu0 0.0
    %1213 = vmatprep.subr.mxu0 0.0
    %1214 = vmatpush2.msra.mxu0 0.0
    %1215 = vmatprep.subr.mxu0 0.0
    %1216 = vmatpush2.msra.mxu0 0.0
    %1217 = vmatprep.subr.mxu0 0.0
    %1218 = vmatpush2.msra.mxu0 0.0
    %1219 = vmatprep.subr.mxu0 0.0
    %1220 = vmatpush2.msra.mxu0 0.0
    %1221 = vmatprep.subr.mxu0 0.0
    %1222 = vmatpush2.msra.mxu0 0.0
    %1223 = vmatprep.subr.mxu0 0.0
    %1224 = vmatpush2.msra.mxu0 0.0
    %1225 = vmatprep.subr.mxu0 0.0
    %1226 = vmatpush2.msra.mxu0 0.0
    %1227 = vmatprep.mubr.f32.mxu0 0.0
    %1228 = vmatmul.mubr.f32.gmra.mxu0 %v1152
    %v1229 = vpop.f32.mrf.mxu0
    %v1230 = vadd.f32 0.0, %v1229
    %v1231 = vpop.f32.mrf.mxu0
    %v1232 = vadd.f32 0.0, %v1231
    %1233 = vdwg.mxu0
    %1234 = vmatprep.subr.mxu0 %v442
    %1235 = vmatpush1.msra.mxu0 %v441
    %1236 = vmatprep.subr.mxu0 %v438
    %1237 = vmatpush1.msra.mxu0 %v437
    %1238 = vmatprep.subr.mxu0 %v434
    %1239 = vmatpush1.msra.mxu0 %v433
    %1240 = vmatprep.subr.mxu0 %v430
    %1241 = vmatpush1.msra.mxu0 %v429
    %1242 = vmatprep.subr.mxu0 %v426
    %1243 = vmatpush1.msra.mxu0 %v425
    %1244 = vmatprep.subr.mxu0 %v422
    %1245 = vmatpush1.msra.mxu0 %v421
    %1246 = vmatprep.subr.mxu0 %v418
    %1247 = vmatpush1.msra.mxu0 %v417
    %1248 = vmatprep.subr.mxu0 %v414
    %1249 = vmatpush1.msra.mxu0 %v413
    %1250 = vmatprep.subr.mxu0 %v410
    %1251 = vmatpush1.msra.mxu0 %v409
    %1252 = vmatprep.subr.mxu0 %v406
    %1253 = vmatpush1.msra.mxu0 %v405
    %1254 = vmatprep.subr.mxu0 %v402
    %1255 = vmatpush1.msra.mxu0 %v401
    %1256 = vmatprep.subr.mxu0 %v398
    %1257 = vmatpush1.msra.mxu0 %v397
    %1258 = vmatprep.subr.mxu0 %v394
    %1259 = vmatpush1.msra.mxu0 %v393
    %1260 = vmatprep.subr.mxu0 %v390
    %1261 = vmatpush1.msra.mxu0 %v389
    %1262 = vmatprep.subr.mxu0 %v386
    %1263 = vmatpush1.msra.mxu0 %v385
    %1264 = vmatprep.subr.mxu0 %v382
    %1265 = vmatpush1.msra.mxu0 %v381
    %1266 = vmatprep.subr.mxu0 0.0
    %1267 = vmatpush2.msra.mxu0 0.0
    %1268 = vmatprep.subr.mxu0 0.0
    %1269 = vmatpush2.msra.mxu0 0.0
    %1270 = vmatprep.subr.mxu0 0.0
    %1271 = vmatpush2.msra.mxu0 0.0
    %1272 = vmatprep.subr.mxu0 0.0
    %1273 = vmatpush2.msra.mxu0 0.0
    %1274 = vmatprep.subr.mxu0 0.0
    %1275 = vmatpush2.msra.mxu0 0.0
    %1276 = vmatprep.subr.mxu0 0.0
    %1277 = vmatpush2.msra.mxu0 0.0
    %1278 = vmatprep.subr.mxu0 0.0
    %1279 = vmatpush2.msra.mxu0 0.0
    %1280 = vmatprep.subr.mxu0 0.0
    %1281 = vmatpush2.msra.mxu0 0.0
    %1282 = vmatprep.subr.mxu0 0.0
    %1283 = vmatpush2.msra.mxu0 0.0
    %1284 = vmatprep.subr.mxu0 0.0
    %1285 = vmatpush2.msra.mxu0 0.0
    %1286 = vmatprep.subr.mxu0 0.0
    %1287 = vmatpush2.msra.mxu0 0.0
    %1288 = vmatprep.subr.mxu0 0.0
    %1289 = vmatpush2.msra.mxu0 0.0
    %1290 = vmatprep.subr.mxu0 0.0
    %1291 = vmatpush2.msra.mxu0 0.0
    %1292 = vmatprep.subr.mxu0 0.0
    %1293 = vmatpush2.msra.mxu0 0.0
    %1294 = vmatprep.subr.mxu0 0.0
    %1295 = vmatpush2.msra.mxu0 0.0
    %1296 = vmatprep.subr.mxu0 0.0
    %1297 = vmatpush2.msra.mxu0 0.0
    %1298 = vmatprep.mubr.f32.mxu0 0.0
    %1299 = vmatmul.mubr.f32.gmra.mxu0 %v1152
    %v1300 = vpop.f32.mrf.mxu0
    %v1301 = vadd.f32 0.0, %v1300
    %v1302 = vpop.f32.mrf.mxu0
    %v1303 = vadd.f32 0.0, %v1302
    %1304 = vdwg.mxu0
    %v1305 = vadd.f32 %v1159, %v1230
    %v1306 = vadd.f32 %v1160, %v1232
    %v1307 = vadd.f32 %v1161, %v1301
    %v1308 = vadd.f32 %v1162, %v1303
    %v1309 = vxor.u32 %v1305, 2147483648
    %v1310 = vxor.u32 %v1306, 2147483648
    %v1311 = vxor.u32 %v1307, 2147483648
    %v1312 = vmul.f32 %v1309, 1.442695
    %v1313 = vpow.pop %v1312
    %v1314 = vmul.f32 %v1310, 1.442695
    %v1315 = vpow.pop %v1314
    %v1316 = vmul.f32 %v1311, 1.442695
    %v1317 = vpow.pop %v1316
    %v1318 = vadd.f32 %v1313, 1.0
    %v1319 = vadd.f32 %v1315, 1.0
    %v1320 = vadd.f32 %v1317, 1.0
    %v1321 = vrcp.pop %v1318
    %v1322 = vmul.f32 1.0, %v1321
    %v1323 = vrcp.pop %v1319
    %v1324 = vmul.f32 1.0, %v1323
    %v1325 = vrcp.pop %v1320
    %v1326 = vmul.f32 1.0, %v1325
    %v1327 = vtanh.pop %v1308
    %v1328 = vmul.f32 %v1324, %v1150
    %v1329 = vmul.f32 %v1322, %v1327
    %v1330 = vadd.f32 %v1328, %v1329
    %v1331 = vtanh.pop %v1330
    %v1332 = vmul.f32 %v1326, %v1331
    %vm1333 = vcmp.eq.s32.totalorder %v374, 4
    %v1334 = vlaneseq
    %v1335 = vshrl.u32 %v1334, 7
    %v1336 = vsub.s32 0, %v1335
    %v1337 = vrot.slane %v1332, %v1336
    %v1338 = vsel %vm1333, %v1337, %v1158
    %v1339 = vld [vmem:[#allocation2 + $0xa0] sm:$0xff]
    %v1340 = vld [vmem:[#allocation2 + $0xa8] sm:$0xff]
    %v1341 = vld [vmem:[#allocation2 + $0xb0] sm:$0xff]
    %v1342 = vld [vmem:[#allocation2 + $0xb8] sm:$0xff]
    %1343 = vmatprep.subr.mxu0 %v440
    %1344 = vmatpush1.msra.mxu0 %v439
    %1345 = vmatprep.subr.mxu0 %v436
    %1346 = vmatpush1.msra.mxu0 %v435
    %1347 = vmatprep.subr.mxu0 %v432
    %1348 = vmatpush1.msra.mxu0 %v431
    %1349 = vmatprep.subr.mxu0 %v428
    %1350 = vmatpush1.msra.mxu0 %v427
    %1351 = vmatprep.subr.mxu0 %v424
    %1352 = vmatpush1.msra.mxu0 %v423
    %1353 = vmatprep.subr.mxu0 %v420
    %1354 = vmatpush1.msra.mxu0 %v419
    %1355 = vmatprep.subr.mxu0 %v416
    %1356 = vmatpush1.msra.mxu0 %v415
    %1357 = vmatprep.subr.mxu0 %v412
    %1358 = vmatpush1.msra.mxu0 %v411
    %1359 = vmatprep.subr.mxu0 %v408
    %1360 = vmatpush1.msra.mxu0 %v407
    %1361 = vmatprep.subr.mxu0 %v404
    %1362 = vmatpush1.msra.mxu0 %v403
    %1363 = vmatprep.subr.mxu0 %v400
    %1364 = vmatpush1.msra.mxu0 %v399
    %1365 = vmatprep.subr.mxu0 %v396
    %1366 = vmatpush1.msra.mxu0 %v395
    %1367 = vmatprep.subr.mxu0 %v392
    %1368 = vmatpush1.msra.mxu0 %v391
    %1369 = vmatprep.subr.mxu0 %v388
    %1370 = vmatpush1.msra.mxu0 %v387
    %1371 = vmatprep.subr.mxu0 %v384
    %1372 = vmatpush1.msra.mxu0 %v383
    %1373 = vmatprep.subr.mxu0 %v380
    %1374 = vmatpush1.msra.mxu0 %v379
    %1375 = vmatprep.subr.mxu0 0.0
    %1376 = vmatpush2.msra.mxu0 0.0
    %1377 = vmatprep.subr.mxu0 0.0
    %1378 = vmatpush2.msra.mxu0 0.0
    %1379 = vmatprep.subr.mxu0 0.0
    %1380 = vmatpush2.msra.mxu0 0.0
    %1381 = vmatprep.subr.mxu0 0.0
    %1382 = vmatpush2.msra.mxu0 0.0
    %1383 = vmatprep.subr.mxu0 0.0
    %1384 = vmatpush2.msra.mxu0 0.0
    %1385 = vmatprep.subr.mxu0 0.0
    %1386 = vmatpush2.msra.mxu0 0.0
    %1387 = vmatprep.subr.mxu0 0.0
    %1388 = vmatpush2.msra.mxu0 0.0
    %1389 = vmatprep.subr.mxu0 0.0
    %1390 = vmatpush2.msra.mxu0 0.0
    %1391 = vmatprep.subr.mxu0 0.0
    %1392 = vmatpush2.msra.mxu0 0.0
    %1393 = vmatprep.subr.mxu0 0.0
    %1394 = vmatpush2.msra.mxu0 0.0
    %1395 = vmatprep.subr.mxu0 0.0
    %1396 = vmatpush2.msra.mxu0 0.0
    %1397 = vmatprep.subr.mxu0 0.0
    %1398 = vmatpush2.msra.mxu0 0.0
    %1399 = vmatprep.subr.mxu0 0.0
    %1400 = vmatpush2.msra.mxu0 0.0
    %1401 = vmatprep.subr.mxu0 0.0
    %1402 = vmatpush2.msra.mxu0 0.0
    %1403 = vmatprep.subr.mxu0 0.0
    %1404 = vmatpush2.msra.mxu0 0.0
    %1405 = vmatprep.subr.mxu0 0.0
    %1406 = vmatpush2.msra.mxu0 0.0
    %1407 = vmatprep.mubr.f32.mxu0 0.0
    %1408 = vmatmul.mubr.f32.gmra.mxu0 %v1332
    %v1409 = vpop.f32.mrf.mxu0
    %v1410 = vadd.f32 0.0, %v1409
    %v1411 = vpop.f32.mrf.mxu0
    %v1412 = vadd.f32 0.0, %v1411
    %1413 = vdwg.mxu0
    %1414 = vmatprep.subr.mxu0 %v442
    %1415 = vmatpush1.msra.mxu0 %v441
    %1416 = vmatprep.subr.mxu0 %v438
    %1417 = vmatpush1.msra.mxu0 %v437
    %1418 = vmatprep.subr.mxu0 %v434
    %1419 = vmatpush1.msra.mxu0 %v433
    %1420 = vmatprep.subr.mxu0 %v430
    %1421 = vmatpush1.msra.mxu0 %v429
    %1422 = vmatprep.subr.mxu0 %v426
    %1423 = vmatpush1.msra.mxu0 %v425
    %1424 = vmatprep.subr.mxu0 %v422
    %1425 = vmatpush1.msra.mxu0 %v421
    %1426 = vmatprep.subr.mxu0 %v418
    %1427 = vmatpush1.msra.mxu0 %v417
    %1428 = vmatprep.subr.mxu0 %v414
    %1429 = vmatpush1.msra.mxu0 %v413
    %1430 = vmatprep.subr.mxu0 %v410
    %1431 = vmatpush1.msra.mxu0 %v409
    %1432 = vmatprep.subr.mxu0 %v406
    %1433 = vmatpush1.msra.mxu0 %v405
    %1434 = vmatprep.subr.mxu0 %v402
    %1435 = vmatpush1.msra.mxu0 %v401
    %1436 = vmatprep.subr.mxu0 %v398
    %1437 = vmatpush1.msra.mxu0 %v397
    %1438 = vmatprep.subr.mxu0 %v394
    %1439 = vmatpush1.msra.mxu0 %v393
    %1440 = vmatprep.subr.mxu0 %v390
    %1441 = vmatpush1.msra.mxu0 %v389
    %1442 = vmatprep.subr.mxu0 %v386
    %1443 = vmatpush1.msra.mxu0 %v385
    %1444 = vmatprep.subr.mxu0 %v382
    %1445 = vmatpush1.msra.mxu0 %v381
    %1446 = vmatprep.subr.mxu0 0.0
    %1447 = vmatpush2.msra.mxu0 0.0
    %1448 = vmatprep.subr.mxu0 0.0
    %1449 = vmatpush2.msra.mxu0 0.0
    %1450 = vmatprep.subr.mxu0 0.0
    %1451 = vmatpush2.msra.mxu0 0.0
    %1452 = vmatprep.subr.mxu0 0.0
    %1453 = vmatpush2.msra.mxu0 0.0
    %1454 = vmatprep.subr.mxu0 0.0
    %1455 = vmatpush2.msra.mxu0 0.0
    %1456 = vmatprep.subr.mxu0 0.0
    %1457 = vmatpush2.msra.mxu0 0.0
    %1458 = vmatprep.subr.mxu0 0.0
    %1459 = vmatpush2.msra.mxu0 0.0
    %1460 = vmatprep.subr.mxu0 0.0
    %1461 = vmatpush2.msra.mxu0 0.0
    %1462 = vmatprep.subr.mxu0 0.0
    %1463 = vmatpush2.msra.mxu0 0.0
    %1464 = vmatprep.subr.mxu0 0.0
    %1465 = vmatpush2.msra.mxu0 0.0
    %1466 = vmatprep.subr.mxu0 0.0
    %1467 = vmatpush2.msra.mxu0 0.0
    %1468 = vmatprep.subr.mxu0 0.0
    %1469 = vmatpush2.msra.mxu0 0.0
    %1470 = vmatprep.subr.mxu0 0.0
    %1471 = vmatpush2.msra.mxu0 0.0
    %1472 = vmatprep.subr.mxu0 0.0
    %1473 = vmatpush2.msra.mxu0 0.0
    %1474 = vmatprep.subr.mxu0 0.0
    %1475 = vmatpush2.msra.mxu0 0.0
    %1476 = vmatprep.subr.mxu0 0.0
    %1477 = vmatpush2.msra.mxu0 0.0
    %1478 = vmatprep.mubr.f32.mxu0 0.0
    %1479 = vmatmul.mubr.f32.gmra.mxu0 %v1332
    %v1480 = vpop.f32.mrf.mxu0
    %v1481 = vadd.f32 0.0, %v1480
    %v1482 = vpop.f32.mrf.mxu0
    %v1483 = vadd.f32 0.0, %v1482
    %1484 = vdwg.mxu0
    %v1485 = vadd.f32 %v1339, %v1410
    %v1486 = vadd.f32 %v1340, %v1412
    %v1487 = vadd.f32 %v1341, %v1481
    %v1488 = vadd.f32 %v1342, %v1483
    %v1489 = vxor.u32 %v1485, 2147483648
    %v1490 = vxor.u32 %v1486, 2147483648
    %v1491 = vxor.u32 %v1487, 2147483648
    %v1492 = vmul.f32 %v1489, 1.442695
    %v1493 = vpow.pop %v1492
    %v1494 = vmul.f32 %v1490, 1.442695
    %v1495 = vpow.pop %v1494
    %v1496 = vmul.f32 %v1491, 1.442695
    %v1497 = vpow.pop %v1496
    %v1498 = vadd.f32 %v1493, 1.0
    %v1499 = vadd.f32 %v1495, 1.0
    %v1500 = vadd.f32 %v1497, 1.0
    %v1501 = vrcp.pop %v1498
    %v1502 = vmul.f32 1.0, %v1501
    %v1503 = vrcp.pop %v1499
    %v1504 = vmul.f32 1.0, %v1503
    %v1505 = vrcp.pop %v1500
    %v1506 = vmul.f32 1.0, %v1505
    %v1507 = vtanh.pop %v1488
    %v1508 = vmul.f32 %v1504, %v1330
    %v1509 = vmul.f32 %v1502, %v1507
    %v1510 = vadd.f32 %v1508, %v1509
    %v1511 = vtanh.pop %v1510
    %v1512 = vmul.f32 %v1506, %v1511
    %vm1513 = vcmp.eq.s32.totalorder %v374, 5
    %v1514 = vlaneseq
    %v1515 = vshrl.u32 %v1514, 7
    %v1516 = vsub.s32 0, %v1515
    %v1517 = vrot.slane %v1512, %v1516
    %v1518 = vsel %vm1513, %v1517, %v1338
    %v1519 = vld [vmem:[#allocation2 + $0xc0] sm:$0xff]
    %v1520 = vld [vmem:[#allocation2 + $0xc8] sm:$0xff]
    %v1521 = vld [vmem:[#allocation2 + $0xd0] sm:$0xff]
    %v1522 = vld [vmem:[#allocation2 + $0xd8] sm:$0xff]
    %1523 = vmatprep.subr.mxu0 %v440
    %1524 = vmatpush1.msra.mxu0 %v439
    %1525 = vmatprep.subr.mxu0 %v436
    %1526 = vmatpush1.msra.mxu0 %v435
    %1527 = vmatprep.subr.mxu0 %v432
    %1528 = vmatpush1.msra.mxu0 %v431
    %1529 = vmatprep.subr.mxu0 %v428
    %1530 = vmatpush1.msra.mxu0 %v427
    %1531 = vmatprep.subr.mxu0 %v424
    %1532 = vmatpush1.msra.mxu0 %v423
    %1533 = vmatprep.subr.mxu0 %v420
    %1534 = vmatpush1.msra.mxu0 %v419
    %1535 = vmatprep.subr.mxu0 %v416
    %1536 = vmatpush1.msra.mxu0 %v415
    %1537 = vmatprep.subr.mxu0 %v412
    %1538 = vmatpush1.msra.mxu0 %v411
    %1539 = vmatprep.subr.mxu0 %v408
    %1540 = vmatpush1.msra.mxu0 %v407
    %1541 = vmatprep.subr.mxu0 %v404
    %1542 = vmatpush1.msra.mxu0 %v403
    %1543 = vmatprep.subr.mxu0 %v400
    %1544 = vmatpush1.msra.mxu0 %v399
    %1545 = vmatprep.subr.mxu0 %v396
    %1546 = vmatpush1.msra.mxu0 %v395
    %1547 = vmatprep.subr.mxu0 %v392
    %1548 = vmatpush1.msra.mxu0 %v391
    %1549 = vmatprep.subr.mxu0 %v388
    %1550 = vmatpush1.msra.mxu0 %v387
    %1551 = vmatprep.subr.mxu0 %v384
    %1552 = vmatpush1.msra.mxu0 %v383
    %1553 = vmatprep.subr.mxu0 %v380
    %1554 = vmatpush1.msra.mxu0 %v379
    %1555 = vmatprep.subr.mxu0 0.0
    %1556 = vmatpush2.msra.mxu0 0.0
    %1557 = vmatprep.subr.mxu0 0.0
    %1558 = vmatpush2.msra.mxu0 0.0
    %1559 = vmatprep.subr.mxu0 0.0
    %1560 = vmatpush2.msra.mxu0 0.0
    %1561 = vmatprep.subr.mxu0 0.0
    %1562 = vmatpush2.msra.mxu0 0.0
    %1563 = vmatprep.subr.mxu0 0.0
    %1564 = vmatpush2.msra.mxu0 0.0
    %1565 = vmatprep.subr.mxu0 0.0
    %1566 = vmatpush2.msra.mxu0 0.0
    %1567 = vmatprep.subr.mxu0 0.0
    %1568 = vmatpush2.msra.mxu0 0.0
    %1569 = vmatprep.subr.mxu0 0.0
    %1570 = vmatpush2.msra.mxu0 0.0
    %1571 = vmatprep.subr.mxu0 0.0
    %1572 = vmatpush2.msra.mxu0 0.0
    %1573 = vmatprep.subr.mxu0 0.0
    %1574 = vmatpush2.msra.mxu0 0.0
    %1575 = vmatprep.subr.mxu0 0.0
    %1576 = vmatpush2.msra.mxu0 0.0
    %1577 = vmatprep.subr.mxu0 0.0
    %1578 = vmatpush2.msra.mxu0 0.0
    %1579 = vmatprep.subr.mxu0 0.0
    %1580 = vmatpush2.msra.mxu0 0.0
    %1581 = vmatprep.subr.mxu0 0.0
    %1582 = vmatpush2.msra.mxu0 0.0
    %1583 = vmatprep.subr.mxu0 0.0
    %1584 = vmatpush2.msra.mxu0 0.0
    %1585 = vmatprep.subr.mxu0 0.0
    %1586 = vmatpush2.msra.mxu0 0.0
    %1587 = vmatprep.mubr.f32.mxu0 0.0
    %1588 = vmatmul.mubr.f32.gmra.mxu0 %v1512
    %v1589 = vpop.f32.mrf.mxu0
    %v1590 = vadd.f32 0.0, %v1589
    %v1591 = vpop.f32.mrf.mxu0
    %v1592 = vadd.f32 0.0, %v1591
    %1593 = vdwg.mxu0
    %1594 = vmatprep.subr.mxu0 %v442
    %1595 = vmatpush1.msra.mxu0 %v441
    %1596 = vmatprep.subr.mxu0 %v438
    %1597 = vmatpush1.msra.mxu0 %v437
    %1598 = vmatprep.subr.mxu0 %v434
    %1599 = vmatpush1.msra.mxu0 %v433
    %1600 = vmatprep.subr.mxu0 %v430
    %1601 = vmatpush1.msra.mxu0 %v429
    %1602 = vmatprep.subr.mxu0 %v426
    %1603 = vmatpush1.msra.mxu0 %v425
    %1604 = vmatprep.subr.mxu0 %v422
    %1605 = vmatpush1.msra.mxu0 %v421
    %1606 = vmatprep.subr.mxu0 %v418
    %1607 = vmatpush1.msra.mxu0 %v417
    %1608 = vmatprep.subr.mxu0 %v414
    %1609 = vmatpush1.msra.mxu0 %v413
    %1610 = vmatprep.subr.mxu0 %v410
    %1611 = vmatpush1.msra.mxu0 %v409
    %1612 = vmatprep.subr.mxu0 %v406
    %1613 = vmatpush1.msra.mxu0 %v405
    %1614 = vmatprep.subr.mxu0 %v402
    %1615 = vmatpush1.msra.mxu0 %v401
    %1616 = vmatprep.subr.mxu0 %v398
    %1617 = vmatpush1.msra.mxu0 %v397
    %1618 = vmatprep.subr.mxu0 %v394
    %1619 = vmatpush1.msra.mxu0 %v393
    %1620 = vmatprep.subr.mxu0 %v390
    %1621 = vmatpush1.msra.mxu0 %v389
    %1622 = vmatprep.subr.mxu0 %v386
    %1623 = vmatpush1.msra.mxu0 %v385
    %1624 = vmatprep.subr.mxu0 %v382
    %1625 = vmatpush1.msra.mxu0 %v381
    %1626 = vmatprep.subr.mxu0 0.0
    %1627 = vmatpush2.msra.mxu0 0.0
    %1628 = vmatprep.subr.mxu0 0.0
    %1629 = vmatpush2.msra.mxu0 0.0
    %1630 = vmatprep.subr.mxu0 0.0
    %1631 = vmatpush2.msra.mxu0 0.0
    %1632 = vmatprep.subr.mxu0 0.0
    %1633 = vmatpush2.msra.mxu0 0.0
    %1634 = vmatprep.subr.mxu0 0.0
    %1635 = vmatpush2.msra.mxu0 0.0
    %1636 = vmatprep.subr.mxu0 0.0
    %1637 = vmatpush2.msra.mxu0 0.0
    %1638 = vmatprep.subr.mxu0 0.0
    %1639 = vmatpush2.msra.mxu0 0.0
    %1640 = vmatprep.subr.mxu0 0.0
    %1641 = vmatpush2.msra.mxu0 0.0
    %1642 = vmatprep.subr.mxu0 0.0
    %1643 = vmatpush2.msra.mxu0 0.0
    %1644 = vmatprep.subr.mxu0 0.0
    %1645 = vmatpush2.msra.mxu0 0.0
    %1646 = vmatprep.subr.mxu0 0.0
    %1647 = vmatpush2.msra.mxu0 0.0
    %1648 = vmatprep.subr.mxu0 0.0
    %1649 = vmatpush2.msra.mxu0 0.0
    %1650 = vmatprep.subr.mxu0 0.0
    %1651 = vmatpush2.msra.mxu0 0.0
    %1652 = vmatprep.subr.mxu0 0.0
    %1653 = vmatpush2.msra.mxu0 0.0
    %1654 = vmatprep.subr.mxu0 0.0
    %1655 = vmatpush2.msra.mxu0 0.0
    %1656 = vmatprep.subr.mxu0 0.0
    %1657 = vmatpush2.msra.mxu0 0.0
    %1658 = vmatprep.mubr.f32.mxu0 0.0
    %1659 = vmatmul.mubr.f32.gmra.mxu0 %v1512
    %v1660 = vpop.f32.mrf.mxu0
    %v1661 = vadd.f32 0.0, %v1660
    %v1662 = vpop.f32.mrf.mxu0
    %v1663 = vadd.f32 0.0, %v1662
    %1664 = vdwg.mxu0
    %v1665 = vadd.f32 %v1519, %v1590
    %v1666 = vadd.f32 %v1520, %v1592
    %v1667 = vadd.f32 %v1521, %v1661
    %v1668 = vadd.f32 %v1522, %v1663
    %v1669 = vxor.u32 %v1665, 2147483648
    %v1670 = vxor.u32 %v1666, 2147483648
    %v1671 = vxor.u32 %v1667, 2147483648
    %v1672 = vmul.f32 %v1669, 1.442695
    %v1673 = vpow.pop %v1672
    %v1674 = vmul.f32 %v1670, 1.442695
    %v1675 = vpow.pop %v1674
    %v1676 = vmul.f32 %v1671, 1.442695
    %v1677 = vpow.pop %v1676
    %v1678 = vadd.f32 %v1673, 1.0
    %v1679 = vadd.f32 %v1675, 1.0
    %v1680 = vadd.f32 %v1677, 1.0
    %v1681 = vrcp.pop %v1678
    %v1682 = vmul.f32 1.0, %v1681
    %v1683 = vrcp.pop %v1679
    %v1684 = vmul.f32 1.0, %v1683
    %v1685 = vrcp.pop %v1680
    %v1686 = vmul.f32 1.0, %v1685
    %v1687 = vtanh.pop %v1668
    %v1688 = vmul.f32 %v1684, %v1510
    %v1689 = vmul.f32 %v1682, %v1687
    %v1690 = vadd.f32 %v1688, %v1689
    %v1691 = vtanh.pop %v1690
    %v1692 = vmul.f32 %v1686, %v1691
    %vm1693 = vcmp.eq.s32.totalorder %v374, 6
    %v1694 = vlaneseq
    %v1695 = vshrl.u32 %v1694, 7
    %v1696 = vsub.s32 0, %v1695
    %v1697 = vrot.slane %v1692, %v1696
    %v1698 = vsel %vm1693, %v1697, %v1518
    %v1699 = vld [vmem:[#allocation2 + $0xe0] sm:$0xff]
    %v1700 = vld [vmem:[#allocation2 + $0xe8] sm:$0xff]
    %v1701 = vld [vmem:[#allocation2 + $0xf0] sm:$0xff]
    %v1702 = vld [vmem:[#allocation2 + $0xf8] sm:$0xff]
    %1703 = vmatprep.subr.mxu0 %v440
    %1704 = vmatpush1.msra.mxu0 %v439
    %1705 = vmatprep.subr.mxu0 %v436
    %1706 = vmatpush1.msra.mxu0 %v435
    %1707 = vmatprep.subr.mxu0 %v432
    %1708 = vmatpush1.msra.mxu0 %v431
    %1709 = vmatprep.subr.mxu0 %v428
    %1710 = vmatpush1.msra.mxu0 %v427
    %1711 = vmatprep.subr.mxu0 %v424
    %1712 = vmatpush1.msra.mxu0 %v423
    %1713 = vmatprep.subr.mxu0 %v420
    %1714 = vmatpush1.msra.mxu0 %v419
    %1715 = vmatprep.subr.mxu0 %v416
    %1716 = vmatpush1.msra.mxu0 %v415
    %1717 = vmatprep.subr.mxu0 %v412
    %1718 = vmatpush1.msra.mxu0 %v411
    %1719 = vmatprep.subr.mxu0 %v408
    %1720 = vmatpush1.msra.mxu0 %v407
    %1721 = vmatprep.subr.mxu0 %v404
    %1722 = vmatpush1.msra.mxu0 %v403
    %1723 = vmatprep.subr.mxu0 %v400
    %1724 = vmatpush1.msra.mxu0 %v399
    %1725 = vmatprep.subr.mxu0 %v396
    %1726 = vmatpush1.msra.mxu0 %v395
    %1727 = vmatprep.subr.mxu0 %v392
    %1728 = vmatpush1.msra.mxu0 %v391
    %1729 = vmatprep.subr.mxu0 %v388
    %1730 = vmatpush1.msra.mxu0 %v387
    %1731 = vmatprep.subr.mxu0 %v384
    %1732 = vmatpush1.msra.mxu0 %v383
    %1733 = vmatprep.subr.mxu0 %v380
    %1734 = vmatpush1.msra.mxu0 %v379
    %1735 = vmatprep.subr.mxu0 0.0
    %1736 = vmatpush2.msra.mxu0 0.0
    %1737 = vmatprep.subr.mxu0 0.0
    %1738 = vmatpush2.msra.mxu0 0.0
    %1739 = vmatprep.subr.mxu0 0.0
    %1740 = vmatpush2.msra.mxu0 0.0
    %1741 = vmatprep.subr.mxu0 0.0
    %1742 = vmatpush2.msra.mxu0 0.0
    %1743 = vmatprep.subr.mxu0 0.0
    %1744 = vmatpush2.msra.mxu0 0.0
    %1745 = vmatprep.subr.mxu0 0.0
    %1746 = vmatpush2.msra.mxu0 0.0
    %1747 = vmatprep.subr.mxu0 0.0
    %1748 = vmatpush2.msra.mxu0 0.0
    %1749 = vmatprep.subr.mxu0 0.0
    %1750 = vmatpush2.msra.mxu0 0.0
    %1751 = vmatprep.subr.mxu0 0.0
    %1752 = vmatpush2.msra.mxu0 0.0
    %1753 = vmatprep.subr.mxu0 0.0
    %1754 = vmatpush2.msra.mxu0 0.0
    %1755 = vmatprep.subr.mxu0 0.0
    %1756 = vmatpush2.msra.mxu0 0.0
    %1757 = vmatprep.subr.mxu0 0.0
    %1758 = vmatpush2.msra.mxu0 0.0
    %1759 = vmatprep.subr.mxu0 0.0
    %1760 = vmatpush2.msra.mxu0 0.0
    %1761 = vmatprep.subr.mxu0 0.0
    %1762 = vmatpush2.msra.mxu0 0.0
    %1763 = vmatprep.subr.mxu0 0.0
    %1764 = vmatpush2.msra.mxu0 0.0
    %1765 = vmatprep.subr.mxu0 0.0
    %1766 = vmatpush2.msra.mxu0 0.0
    %1767 = vmatprep.mubr.f32.mxu0 0.0
    %1768 = vmatmul.mubr.f32.gmra.mxu0 %v1692
    %v1769 = vpop.f32.mrf.mxu0
    %v1770 = vadd.f32 0.0, %v1769
    %v1771 = vpop.f32.mrf.mxu0
    %v1772 = vadd.f32 0.0, %v1771
    %1773 = vdwg.mxu0
    %1774 = vmatprep.subr.mxu0 %v442
    %1775 = vmatpush1.msra.mxu0 %v441
    %1776 = vmatprep.subr.mxu0 %v438
    %1777 = vmatpush1.msra.mxu0 %v437
    %1778 = vmatprep.subr.mxu0 %v434
    %1779 = vmatpush1.msra.mxu0 %v433
    %1780 = vmatprep.subr.mxu0 %v430
    %1781 = vmatpush1.msra.mxu0 %v429
    %1782 = vmatprep.subr.mxu0 %v426
    %1783 = vmatpush1.msra.mxu0 %v425
    %1784 = vmatprep.subr.mxu0 %v422
    %1785 = vmatpush1.msra.mxu0 %v421
    %1786 = vmatprep.subr.mxu0 %v418
    %1787 = vmatpush1.msra.mxu0 %v417
    %1788 = vmatprep.subr.mxu0 %v414
    %1789 = vmatpush1.msra.mxu0 %v413
    %1790 = vmatprep.subr.mxu0 %v410
    %1791 = vmatpush1.msra.mxu0 %v409
    %1792 = vmatprep.subr.mxu0 %v406
    %1793 = vmatpush1.msra.mxu0 %v405
    %1794 = vmatprep.subr.mxu0 %v402
    %1795 = vmatpush1.msra.mxu0 %v401
    %1796 = vmatprep.subr.mxu0 %v398
    %1797 = vmatpush1.msra.mxu0 %v397
    %1798 = vmatprep.subr.mxu0 %v394
    %1799 = vmatpush1.msra.mxu0 %v393
    %1800 = vmatprep.subr.mxu0 %v390
    %1801 = vmatpush1.msra.mxu0 %v389
    %1802 = vmatprep.subr.mxu0 %v386
    %1803 = vmatpush1.msra.mxu0 %v385
    %1804 = vmatprep.subr.mxu0 %v382
    %1805 = vmatpush1.msra.mxu0 %v381
    %1806 = vmatprep.subr.mxu0 0.0
    %1807 = vmatpush2.msra.mxu0 0.0
    %1808 = vmatprep.subr.mxu0 0.0
    %1809 = vmatpush2.msra.mxu0 0.0
    %1810 = vmatprep.subr.mxu0 0.0
    %1811 = vmatpush2.msra.mxu0 0.0
    %1812 = vmatprep.subr.mxu0 0.0
    %1813 = vmatpush2.msra.mxu0 0.0
    %1814 = vmatprep.subr.mxu0 0.0
    %1815 = vmatpush2.msra.mxu0 0.0
    %1816 = vmatprep.subr.mxu0 0.0
    %1817 = vmatpush2.msra.mxu0 0.0
    %1818 = vmatprep.subr.mxu0 0.0
    %1819 = vmatpush2.msra.mxu0 0.0
    %1820 = vmatprep.subr.mxu0 0.0
    %1821 = vmatpush2.msra.mxu0 0.0
    %1822 = vmatprep.subr.mxu0 0.0
    %1823 = vmatpush2.msra.mxu0 0.0
    %1824 = vmatprep.subr.mxu0 0.0
    %1825 = vmatpush2.msra.mxu0 0.0
    %1826 = vmatprep.subr.mxu0 0.0
    %1827 = vmatpush2.msra.mxu0 0.0
    %1828 = vmatprep.subr.mxu0 0.0
    %1829 = vmatpush2.msra.mxu0 0.0
    %1830 = vmatprep.subr.mxu0 0.0
    %1831 = vmatpush2.msra.mxu0 0.0
    %1832 = vmatprep.subr.mxu0 0.0
    %1833 = vmatpush2.msra.mxu0 0.0
    %1834 = vmatprep.subr.mxu0 0.0
    %1835 = vmatpush2.msra.mxu0 0.0
    %1836 = vmatprep.subr.mxu0 0.0
    %1837 = vmatpush2.msra.mxu0 0.0
    %1838 = vmatprep.mubr.f32.mxu0 0.0
    %1839 = vmatmul.mubr.f32.gmra.mxu0 %v1692
    %v1840 = vpop.f32.mrf.mxu0
    %v1841 = vadd.f32 0.0, %v1840
    %v1842 = vpop.f32.mrf.mxu0
    %v1843 = vadd.f32 0.0, %v1842
    %1844 = vdwg.mxu0
    %v1845 = vadd.f32 %v1699, %v1770
    %v1846 = vadd.f32 %v1700, %v1772
    %v1847 = vadd.f32 %v1701, %v1841
    %v1848 = vadd.f32 %v1702, %v1843
    %v1849 = vxor.u32 %v1845, 2147483648
    %v1850 = vxor.u32 %v1846, 2147483648
    %v1851 = vxor.u32 %v1847, 2147483648
    %v1852 = vmul.f32 %v1849, 1.442695
    %v1853 = vpow.pop %v1852
    %v1854 = vmul.f32 %v1850, 1.442695
    %v1855 = vpow.pop %v1854
    %v1856 = vmul.f32 %v1851, 1.442695
    %v1857 = vpow.pop %v1856
    %v1858 = vadd.f32 %v1853, 1.0
    %v1859 = vadd.f32 %v1855, 1.0
    %v1860 = vadd.f32 %v1857, 1.0
    %v1861 = vrcp.pop %v1858
    %v1862 = vmul.f32 1.0, %v1861
    %v1863 = vrcp.pop %v1859
    %v1864 = vmul.f32 1.0, %v1863
    %v1865 = vrcp.pop %v1860
    %v1866 = vmul.f32 1.0, %v1865
    %v1867 = vtanh.pop %v1848
    %v1868 = vmul.f32 %v1864, %v1690
    %v1869 = vmul.f32 %v1862, %v1867
    %v1870 = vadd.f32 %v1868, %v1869
    %v1871 = vtanh.pop %v1870
    %v1872 = vmul.f32 %v1866, %v1871
    %vm1873 = vcmp.eq.s32.totalorder %v374, 7
    %v1874 = vlaneseq
    %v1875 = vshrl.u32 %v1874, 7
    %v1876 = vsub.s32 0, %v1875
    %v1877 = vrot.slane %v1872, %v1876
    %v1878 = vsel %vm1873, %v1877, %v1698
    %v1879 = vld [vmem:[#allocation6] sm:$0xff]
    %v1880 = vld [vmem:[#allocation6 + $0x8] sm:$0xff]
    %v1881 = vld [vmem:[#allocation6 + $0x10] sm:$0xff]
    %v1882 = vld [vmem:[#allocation6 + $0x18] sm:$0xff]
    %v1883 = vld [vmem:[#allocation6 + $0x20] sm:$0xff]
    %v1884 = vld [vmem:[#allocation6 + $0x28] sm:$0xff]
    %v1885 = vld [vmem:[#allocation6 + $0x30] sm:$0xff]
    %v1886 = vld [vmem:[#allocation6 + $0x38] sm:$0xff]
    %v1887 = vld [vmem:[#allocation6 + $0x40] sm:$0xff]
    %v1888 = vld [vmem:[#allocation6 + $0x48] sm:$0xff]
    %v1889 = vld [vmem:[#allocation6 + $0x50] sm:$0xff]
    %v1890 = vld [vmem:[#allocation6 + $0x58] sm:$0xff]
    %v1891 = vld [vmem:[#allocation6 + $0x60] sm:$0xff]
    %v1892 = vld [vmem:[#allocation6 + $0x68] sm:$0xff]
    %v1893 = vld [vmem:[#allocation6 + $0x70] sm:$0xff]
    %v1894 = vld [vmem:[#allocation6 + $0x78] sm:$0xff]
    %v1895 = vld [vmem:[%s5] sm:$0x1]
    %v1897 = vlaneseq
    %v1898 = vshrl.u32 %v1897, 7
    %v1899 = vsub.s32 0, %v1898
    %v1900 = vrot.slane %v1895, %v1899
    %1902 = vmatprep.subr.mxu0 0.0
    %1903 = vmatpush1.msra.mxu0 %v1894
    %1904 = vmatprep.subr.mxu0 0.0
    %1905 = vmatpush1.msra.mxu0 %v1893
    %1906 = vmatprep.subr.mxu0 0.0
    %1907 = vmatpush1.msra.mxu0 %v1892
    %1908 = vmatprep.subr.mxu0 0.0
    %1909 = vmatpush1.msra.mxu0 %v1891
    %1910 = vmatprep.subr.mxu0 0.0
    %1911 = vmatpush1.msra.mxu0 %v1890
    %1912 = vmatprep.subr.mxu0 0.0
    %1913 = vmatpush1.msra.mxu0 %v1889
    %1914 = vmatprep.subr.mxu0 0.0
    %1915 = vmatpush1.msra.mxu0 %v1888
    %1916 = vmatprep.subr.mxu0 0.0
    %1917 = vmatpush1.msra.mxu0 %v1887
    %1918 = vmatprep.subr.mxu0 0.0
    %1919 = vmatpush1.msra.mxu0 %v1886
    %1920 = vmatprep.subr.mxu0 0.0
    %1921 = vmatpush1.msra.mxu0 %v1885
    %1922 = vmatprep.subr.mxu0 0.0
    %1923 = vmatpush1.msra.mxu0 %v1884
    %1924 = vmatprep.subr.mxu0 0.0
    %1925 = vmatpush1.msra.mxu0 %v1883
    %1926 = vmatprep.subr.mxu0 0.0
    %1927 = vmatpush1.msra.mxu0 %v1882
    %1928 = vmatprep.subr.mxu0 0.0
    %1929 = vmatpush1.msra.mxu0 %v1881
    %1930 = vmatprep.subr.mxu0 0.0
    %1931 = vmatpush1.msra.mxu0 %v1880
    %1932 = vmatprep.subr.mxu0 0.0
    %1933 = vmatpush1.msra.mxu0 %v1879
    %1934 = vmatprep.subr.mxu0 0.0
    %1935 = vmatpush2.msra.mxu0 0.0
    %1936 = vmatprep.subr.mxu0 0.0
    %1937 = vmatpush2.msra.mxu0 0.0
    %1938 = vmatprep.subr.mxu0 0.0
    %1939 = vmatpush2.msra.mxu0 0.0
    %1940 = vmatprep.subr.mxu0 0.0
    %1941 = vmatpush2.msra.mxu0 0.0
    %1942 = vmatprep.subr.mxu0 0.0
    %1943 = vmatpush2.msra.mxu0 0.0
    %1944 = vmatprep.subr.mxu0 0.0
    %1945 = vmatpush2.msra.mxu0 0.0
    %1946 = vmatprep.subr.mxu0 0.0
    %1947 = vmatpush2.msra.mxu0 0.0
    %1948 = vmatprep.subr.mxu0 0.0
    %1949 = vmatpush2.msra.mxu0 0.0
    %1950 = vmatprep.subr.mxu0 0.0
    %1951 = vmatpush2.msra.mxu0 0.0
    %1952 = vmatprep.subr.mxu0 0.0
    %1953 = vmatpush2.msra.mxu0 0.0
    %1954 = vmatprep.subr.mxu0 0.0
    %1955 = vmatpush2.msra.mxu0 0.0
    %1956 = vmatprep.subr.mxu0 0.0
    %1957 = vmatpush2.msra.mxu0 0.0
    %1958 = vmatprep.subr.mxu0 0.0
    %1959 = vmatpush2.msra.mxu0 0.0
    %1960 = vmatprep.subr.mxu0 0.0
    %1961 = vmatpush2.msra.mxu0 0.0
    %1962 = vmatprep.subr.mxu0 0.0
    %1963 = vmatpush2.msra.mxu0 0.0
    %1964 = vmatprep.subr.mxu0 0.0
    %1965 = vmatpush2.msra.mxu0 0.0
    %1966 = vmatprep.mubr.f32.mxu0 0.0
    %1967 = vmatmul.mubr.f32.gmra.mxu0 %v1878
    %v1968 = vpop.f32.mrf.mxu0
    %v1969 = vadd.f32 %v1900, %v1968
    %v1970 = vpop.f32.mrf.mxu0
    %1971 = vdwg.mxu0
    %1972 = vmax.xlane.f32.xlu0 %v1969
    %v1973 = vpop.xlane.xlu0 %1972
    %v1974 = vsub.f32 %v1969, %v1973
    %v1975 = vmul.f32 %v1974, 1.442695
    %v1976 = vpow.pop %v1975
    %1977 = vadd.xlane.f32.xlu0 %v1976
    %v1978 = vpop.xlane.xlu0 %1977
    %v1979 = vrcp.pop %v1978
    %v1980 = vmul.f32 %v1976, %v1979
    %1981 = vst [vmem:[#allocation8] sm:$0xff] %v1980
    // Predicated region
    $region34: #{portfolio_lstm_forward.1} parent=1 // pred_check
      _
    $region35: #{portfolio_lstm_forward.1} parent=1 // pred_check_branch
      %1983 = sbr.rel (0) target = $region37
    $region36: #{portfolio_lstm_forward.1} parent=1 // pred_region
      %s1985 = ssub.s32 128, 128
      %1986 = vsyncadd [#allocation5], %s1985
      %s1988 = sshll.u32 [#allocation8], 4
      %s1989 = int_to_ptr.vmem [resolvable:$true] %s1988
      %1991 = dma.vmem_to_hbm [thread:$0]  %s1989, 128, %s6, [#allocation5]
    $region37: #{portfolio_lstm_forward.1} parent=1 // pred_fallthru
      _
    // Predicated region
    $region38: #{portfolio_lstm_forward.1} parent=1 // pred_check
      _
    $region39: #{portfolio_lstm_forward.1} parent=1 // pred_check_branch
      %1993 = sbr.rel (0) target = $region41
    $region40: #{portfolio_lstm_forward.1} parent=1 // pred_region
      %1994 = dma.done [#allocation5], 128
    $region41: #{portfolio_lstm_forward.1} parent=1 // pred_fallthru
      _
    %1995 = vsyncpa [#allocation4], 1
    %1996 = vsyncpa [#allocation7], 1
    %1997 = vsyncpa [#allocation5], 1

</llo_original>
